<compile_context>
chip_gen: v6e
topology: v6e:2x2x1
jax: 0.10.0
libtpu: 0.0.40
codegen_flags: <defaults>
</compile_context>

<pallas_src>
import functools

import jax
import jax.numpy as jnp
import numpy as np
from jax import lax
from jax.experimental import pallas as pl
from jax.experimental.pallas import tpu as pltpu

_LANE = 128


def _round_up(v, m):
    return ((v + m - 1) // m) * m


# -----------------------------------------------------------------------------
# Pallas kernel: whole GGCU forward in one invocation.
#   Ax = A @ x                                    (once)
#   layer 0 (h0 == 0):  _h = bh[0]; xg = Ax @ Wx[0] + bx[0]; h = gate(_h, xg)
#   layer l >= 1:
#     Ah  = A @ h
#     _h  = Ah @ Wh_l + bh_l                      (conv_h, reassociated)
#     xg  = Ax @ Wx_l + bx_l                      (conv_x, reassociated)
#     [f|u] broadcast = alpha * tanh(_h @ Wg_h + xg @ Wg_x + bg)   (N, 2*Hp)
#     h   = (1 + f) * _h + (1 + u) * xg + Ah      (res conv == A @ h)
#   finally: y = h @ Wfc_pad + bfc_pad            (lane-dense padded output)
# -----------------------------------------------------------------------------
def _ggcu_kernel(alpha, n_layers, hp,
                 a_ref, x_ref,
                 wh_ref, bh_ref, wx_ref, bx_ref,
                 wg_h_ref, wg_x_ref, bg_ref,
                 wfc_ref, bfc_ref,
                 y_ref):
    a = a_ref[...]                         # (N, N) normalized adjacency
    n = a.shape[0]

    # A @ x computed once (reassociation: A @ (x @ Wx) == (A @ x) @ Wx).
    ax = jnp.dot(a, x_ref[...], preferred_element_type=jnp.float32)   # (N, Fin)

    wg_h = wg_h_ref[...]                   # (Hp, 2*Hp) lane-replicated gate weights
    wg_x = wg_x_ref[...]                   # (Hp, 2*Hp)
    bg = bg_ref[...]                       # (1, 2*Hp)

    def gated(_h, xg):
        # Both gate logits come out of the MXU already broadcast across lanes:
        # columns [0, Hp) all carry the f logit, [Hp, 2Hp) all carry u.
        logits = (jnp.dot(_h, wg_h, preferred_element_type=jnp.float32)
                  + jnp.dot(xg, wg_x, preferred_element_type=jnp.float32)
                  + bg)
        g = alpha * jnp.tanh(logits)       # (N, 2*Hp), EUP
        f = g[:, :hp]                      # 128-aligned, full-width tiles
        u = g[:, hp:]
        return (1.0 + f) * _h + (1.0 + u) * xg

    # ---- layer 0 peeled: h0 == 0  =>  A @ h == 0, res == 0, _h == bh[0] ----
    _h0 = jnp.zeros((n, hp), jnp.float32) + bh_ref[0]
    xg0 = jnp.dot(ax, wx_ref[0], preferred_element_type=jnp.float32) + bx_ref[0]
    h = gated(_h0, xg0)

    # ---- layers 1 .. L-1 ----
    def layer(l, h):
        ah = jnp.dot(a, h, preferred_element_type=jnp.float32)        # (N, Hp)
        _h = (jnp.dot(ah, wh_ref[l], preferred_element_type=jnp.float32)
              + bh_ref[l])
        xg = (jnp.dot(ax, wx_ref[l], preferred_element_type=jnp.float32)
              + bx_ref[l])
        return gated(_h, xg) + ah          # + res(h): identity-weight GCNConv

    h = lax.fori_loop(1, n_layers, layer, h, unroll=(n_layers <= 8))

    # final fc into a lane-dense padded tile -> unmasked stores
    y_ref[...] = (jnp.dot(h, wfc_ref[...], preferred_element_type=jnp.float32)
                  + bfc_ref[...])


def _compute_vmem_limit(args, out_struct):
    nbytes = sum(int(np.prod(a.shape)) * a.dtype.itemsize for a in args)
    nbytes += int(np.prod(out_struct.shape)) * np.dtype(out_struct.dtype).itemsize
    # resident inputs/outputs (x2 headroom) + margin for unrolled layer temps
    return int(min(2 * nbytes + (4 << 20), 56 << 20))   # stay under v7x 64 MiB


def ggcu_forward(a_norm, x, params, *, alpha):
    """params: dict of stacked per-layer GCN weights + shared gate/fc weights."""
    N = a_norm.shape[0]
    L, H, _ = params["wh_t"].shape
    Fin = params["wx_t"].shape[1]
    Fout = params["wfc_t"].shape[1]
    Hp = _round_up(H, _LANE)
    Fout_p = _round_up(Fout, _LANE)
    f32 = jnp.float32

    # ---- pad the hidden dim (and fc output) to 128 lanes: lane-dense tiles.
    wh_p = jnp.zeros((L, Hp, Hp), f32).at[:, :H, :H].set(params["wh_t"])
    bh_p = jnp.zeros((L, 1, Hp), f32).at[:, :, :H].set(params["bh"])
    wx_p = jnp.zeros((L, Fin, Hp), f32).at[:, :, :H].set(params["wx_t"])
    bx_p = jnp.zeros((L, 1, Hp), f32).at[:, :, :H].set(params["bx"])

    # ---- gate weights replicated across the lane dim so the MXU produces the
    # gate logits already broadcast to Hp lanes per gate.
    def _rep(w_1h):   # (1, H) -> (Hp, Hp), every column == zero-padded w
        col = jnp.zeros((Hp, 1), f32).at[:H, 0].set(w_1h[0])
        return jnp.broadcast_to(col, (Hp, Hp))

    wg_h = jnp.concatenate([_rep(params["wf_h"]), _rep(params["wu_h"])], axis=1)
    wg_x = jnp.concatenate([_rep(params["wf_x"]), _rep(params["wu_x"])], axis=1)
    bg = jnp.concatenate([jnp.full((1, Hp), params["bf"][0, 0], f32),
                          jnp.full((1, Hp), params["bu"][0, 0], f32)], axis=1)

    wfc_p = jnp.zeros((Hp, Fout_p), f32).at[:H, :Fout].set(params["wfc_t"])
    bfc_p = jnp.zeros((1, Fout_p), f32).at[:, :Fout].set(params["bfc"])

    args = (a_norm, x, wh_p, bh_p, wx_p, bx_p, wg_h, wg_x, bg, wfc_p, bfc_p)
    out_struct = jax.ShapeDtypeStruct((N, Fout_p), f32)

    y_pad = pl.pallas_call(
        functools.partial(_ggcu_kernel, float(alpha), int(L), int(Hp)),
        out_shape=out_struct,
        # no grid: every input is a whole-array VMEM block loaded once
        compiler_params=pltpu.CompilerParams(
            vmem_limit_bytes=_compute_vmem_limit(args, out_struct)),
    )(*args)
    return y_pad[:, :Fout]


# -----------------------------------------------------------------------------
# Plain-JAX glue
# -----------------------------------------------------------------------------
def gcn_norm_dense(edge_index, num_nodes):
    """Dense D^{-1/2} (A + I) D^{-1/2}, matching torch_geometric GCNConv norm."""
    src, dst = edge_index[0], edge_index[1]
    a = jnp.zeros((num_nodes, num_nodes), jnp.float32).at[dst, src].add(1.0)
    a = a + jnp.eye(num_nodes, dtype=jnp.float32)
    deg = a.sum(axis=1)
    dinv = jnp.where(deg > 0, 1.0 / jnp.sqrt(deg), 0.0)
    return dinv[:, None] * a * dinv[None, :]


def init_params(key, n_input, n_hidden, n_output, n_layers):
    ks = jax.random.split(key, 8)
    s = 0.1
    wh = s * jax.random.normal(ks[0], (n_layers, n_hidden, n_hidden), jnp.float32)
    bh = s * jax.random.normal(ks[1], (n_layers, 1, n_hidden), jnp.float32)
    wx = s * jax.random.normal(ks[2], (n_layers, n_input, n_hidden), jnp.float32)
    bx = s * jax.random.normal(ks[3], (n_layers, 1, n_hidden), jnp.float32)
    wf = s * jax.random.normal(ks[4], (1, 2 * n_hidden), jnp.float32)
    wu = s * jax.random.normal(ks[5], (1, 2 * n_hidden), jnp.float32)
    wfc = s * jax.random.normal(ks[6], (n_hidden, n_output), jnp.float32)
    bfc = s * jax.random.normal(ks[7], (1, n_output), jnp.float32)
    return {
        "wh_t": wh, "bh": bh, "wx_t": wx, "bx": bx,
        "wf_h": wf[:, :n_hidden], "wf_x": wf[:, n_hidden:],
        "bf": jnp.full((1, 1), 0.05, jnp.float32),
        "wu_h": wu[:, :n_hidden], "wu_x": wu[:, n_hidden:],
        "bu": jnp.full((1, 1), -0.05, jnp.float32),
        "wfc_t": wfc, "bfc": bfc,
    }


def ref_forward(a_norm, x, params, *, alpha):
    """Pure-JAX reference of the PyTorch forward (eval mode)."""
    n = x.shape[0]
    h = jnp.zeros((n, params["wh_t"].shape[2]), jnp.float32)
    L = params["wh_t"].shape[0]
    for l in range(L):
        _h = a_norm @ (h @ params["wh_t"][l]) + params["bh"][l]
        xg = a_norm @ (x @ params["wx_t"][l]) + params["bx"][l]
        f_logit = ((_h * params["wf_h"]).sum(-1, keepdims=True)
                   + (xg * params["wf_x"]).sum(-1, keepdims=True) + params["bf"])
        u_logit = ((_h * params["wu_h"]).sum(-1, keepdims=True)
                   + (xg * params["wu_x"]).sum(-1, keepdims=True) + params["bu"])
        f = alpha * jnp.tanh(f_logit)
        u = alpha * jnp.tanh(u_logit)
        h = (1.0 + f) * _h + (1.0 + u) * xg + a_norm @ h
    return h @ params["wfc_t"] + params["bfc"]


if __name__ == "__main__":
    N_NODES, N_INPUT, N_HIDDEN, N_OUTPUT, N_LAYERS = 16, 8, 32, 4, 3
    ALPHA = 0.2

    key = jax.random.PRNGKey(0)
    kx, kp = jax.random.split(key)

    x = jax.random.normal(kx, (N_NODES, N_INPUT), jnp.float32)
    # Deterministic ring graph (both directions)
    src = jnp.arange(N_NODES, dtype=jnp.int32)
    dst = (src + 1) % N_NODES
    edge_index = jnp.stack([jnp.concatenate([src, dst]),
                            jnp.concatenate([dst, src])], axis=0)

    params = init_params(kp, N_INPUT, N_HIDDEN, N_OUTPUT, N_LAYERS)
    a_norm = gcn_norm_dense(edge_index, N_NODES)

    y = ggcu_forward(a_norm, x, params, alpha=ALPHA)
    y = jax.block_until_ready(y)

    y_ref = ref_forward(a_norm, x, params, alpha=ALPHA)
    np.testing.assert_allclose(np.asarray(y), np.asarray(y_ref),
                               rtol=1e-4, atol=1e-4)
    print("KERNEL_OK")
</pallas_src>

<mosaic_0001>
module attributes {stable_mosaic.version = 11 : i64} {
  func.func @_ggcu_kernel(%arg0: memref<16x16xf32, #tpu.memory_space<vmem>>, %arg1: memref<16x8xf32, #tpu.memory_space<vmem>>, %arg2: memref<3x128x128xf32, #tpu.memory_space<vmem>>, %arg3: memref<3x1x128xf32, #tpu.memory_space<vmem>>, %arg4: memref<3x8x128xf32, #tpu.memory_space<vmem>>, %arg5: memref<3x1x128xf32, #tpu.memory_space<vmem>>, %arg6: memref<128x256xf32, #tpu.memory_space<vmem>>, %arg7: memref<128x256xf32, #tpu.memory_space<vmem>>, %arg8: memref<1x256xf32, #tpu.memory_space<vmem>>, %arg9: memref<128x128xf32, #tpu.memory_space<vmem>>, %arg10: memref<1x128xf32, #tpu.memory_space<vmem>>, %arg11: memref<16x128xf32, #tpu.memory_space<vmem>>) attributes {dimension_semantics = [], scalar_prefetch = 0 : i64, scratch_operands = 0 : i64, tpu.core_type = #tpu.core_type<tc>} {
    %c0 = arith.constant 0 : index
    %c0_0 = arith.constant 0 : index
    %0 = vector.load %arg0[%c0, %c0_0] : memref<16x16xf32, #tpu.memory_space<vmem>>, vector<16x16xf32>
    %c0_1 = arith.constant 0 : index
    %c0_2 = arith.constant 0 : index
    %1 = vector.load %arg1[%c0_1, %c0_2] : memref<16x8xf32, #tpu.memory_space<vmem>>, vector<16x8xf32>
    %cst = arith.constant dense<0.000000e+00> : vector<16x8xf32>
    %2 = tpu.matmul %0, %1, %cst {dimension_numbers = #tpu.dot_dimension_numbers<[1], [0], [0], [1], [0, 0, 1, 1], [], []>} : vector<16x16xf32>, vector<16x8xf32>, vector<16x8xf32> -> vector<16x8xf32>
    %c0_3 = arith.constant 0 : index
    %c0_4 = arith.constant 0 : index
    %3 = vector.load %arg6[%c0_3, %c0_4] : memref<128x256xf32, #tpu.memory_space<vmem>>, vector<128x256xf32>
    %c0_5 = arith.constant 0 : index
    %c0_6 = arith.constant 0 : index
    %4 = vector.load %arg7[%c0_5, %c0_6] : memref<128x256xf32, #tpu.memory_space<vmem>>, vector<128x256xf32>
    %c0_7 = arith.constant 0 : index
    %c0_8 = arith.constant 0 : index
    %5 = vector.load %arg8[%c0_7, %c0_8] : memref<1x256xf32, #tpu.memory_space<vmem>>, vector<1x256xf32>
    %cst_9 = arith.constant 0.000000e+00 : f32
    %6 = vector.broadcast %cst_9 : f32 to vector<16x128xf32>
    %c0_10 = arith.constant 0 : index
    %c0_11 = arith.constant 0 : index
    %c0_12 = arith.constant 0 : index
    %7 = vector.load %arg3[%c0_10, %c0_11, %c0_12] : memref<3x1x128xf32, #tpu.memory_space<vmem>>, vector<1x1x128xf32>
    %8 = vector.shape_cast %7 : vector<1x1x128xf32> to vector<1x128xf32>
    %9 = vector.broadcast %8 : vector<1x128xf32> to vector<16x128xf32>
    %10 = arith.addf %6, %9 : vector<16x128xf32>
    %c0_13 = arith.constant 0 : index
    %c0_14 = arith.constant 0 : index
    %c0_15 = arith.constant 0 : index
    %11 = vector.load %arg4[%c0_13, %c0_14, %c0_15] : memref<3x8x128xf32, #tpu.memory_space<vmem>>, vector<1x8x128xf32>
    %12 = vector.shape_cast %11 : vector<1x8x128xf32> to vector<8x128xf32>
    %cst_16 = arith.constant dense<0.000000e+00> : vector<16x128xf32>
    %13 = tpu.matmul %2, %12, %cst_16 {dimension_numbers = #tpu.dot_dimension_numbers<[1], [0], [0], [1], [0, 0, 1, 1], [], []>} : vector<16x8xf32>, vector<8x128xf32>, vector<16x128xf32> -> vector<16x128xf32>
    %c0_17 = arith.constant 0 : index
    %c0_18 = arith.constant 0 : index
    %c0_19 = arith.constant 0 : index
    %14 = vector.load %arg5[%c0_17, %c0_18, %c0_19] : memref<3x1x128xf32, #tpu.memory_space<vmem>>, vector<1x1x128xf32>
    %15 = vector.shape_cast %14 : vector<1x1x128xf32> to vector<1x128xf32>
    %16 = vector.broadcast %15 : vector<1x128xf32> to vector<16x128xf32>
    %17 = arith.addf %13, %16 : vector<16x128xf32>
    %cst_20 = arith.constant dense<0.000000e+00> : vector<16x256xf32>
    %18 = tpu.matmul %10, %3, %cst_20 {dimension_numbers = #tpu.dot_dimension_numbers<[1], [0], [0], [1], [0, 0, 1, 1], [], []>} : vector<16x128xf32>, vector<128x256xf32>, vector<16x256xf32> -> vector<16x256xf32>
    %cst_21 = arith.constant dense<0.000000e+00> : vector<16x256xf32>
    %19 = tpu.matmul %17, %4, %cst_21 {dimension_numbers = #tpu.dot_dimension_numbers<[1], [0], [0], [1], [0, 0, 1, 1], [], []>} : vector<16x128xf32>, vector<128x256xf32>, vector<16x256xf32> -> vector<16x256xf32>
    %20 = arith.addf %18, %19 : vector<16x256xf32>
    %21 = vector.broadcast %5 : vector<1x256xf32> to vector<16x256xf32>
    %22 = arith.addf %20, %21 : vector<16x256xf32>
    %23 = math.tanh %22 : vector<16x256xf32>
    %cst_22 = arith.constant 2.000000e-01 : f32
    %24 = vector.broadcast %cst_22 : f32 to vector<16x256xf32>
    %25 = arith.mulf %24, %23 : vector<16x256xf32>
    %26 = vector.extract_strided_slice %25 {offsets = [0, 0], sizes = [16, 128], strides = [1, 1]} : vector<16x256xf32> to vector<16x128xf32>
    %27 = vector.extract_strided_slice %25 {offsets = [0, 128], sizes = [16, 128], strides = [1, 1]} : vector<16x256xf32> to vector<16x128xf32>
    %cst_23 = arith.constant 1.000000e+00 : f32
    %28 = vector.broadcast %cst_23 : f32 to vector<16x128xf32>
    %29 = arith.addf %28, %26 : vector<16x128xf32>
    %30 = arith.mulf %29, %10 : vector<16x128xf32>
    %cst_24 = arith.constant 1.000000e+00 : f32
    %31 = vector.broadcast %cst_24 : f32 to vector<16x128xf32>
    %32 = arith.addf %31, %27 : vector<16x128xf32>
    %33 = arith.mulf %32, %17 : vector<16x128xf32>
    %34 = arith.addf %30, %33 : vector<16x128xf32>
    %c1_i32 = arith.constant 1 : i32
    %cst_25 = arith.constant dense<0.000000e+00> : vector<16x128xf32>
    %35 = tpu.matmul %0, %34, %cst_25 {dimension_numbers = #tpu.dot_dimension_numbers<[1], [0], [0], [1], [0, 0, 1, 1], [], []>} : vector<16x16xf32>, vector<16x128xf32>, vector<16x128xf32> -> vector<16x128xf32>
    %36 = arith.index_cast %c1_i32 : i32 to index
    %c0_26 = arith.constant 0 : index
    %c0_27 = arith.constant 0 : index
    %37 = vector.load %arg2[%36, %c0_26, %c0_27] : memref<3x128x128xf32, #tpu.memory_space<vmem>>, vector<1x128x128xf32>
    %38 = vector.shape_cast %37 : vector<1x128x128xf32> to vector<128x128xf32>
    %cst_28 = arith.constant dense<0.000000e+00> : vector<16x128xf32>
    %39 = tpu.matmul %35, %38, %cst_28 {dimension_numbers = #tpu.dot_dimension_numbers<[1], [0], [0], [1], [0, 0, 1, 1], [], []>} : vector<16x128xf32>, vector<128x128xf32>, vector<16x128xf32> -> vector<16x128xf32>
    %40 = arith.index_cast %c1_i32 : i32 to index
    %c0_29 = arith.constant 0 : index
    %c0_30 = arith.constant 0 : index
    %41 = vector.load %arg3[%40, %c0_29, %c0_30] : memref<3x1x128xf32, #tpu.memory_space<vmem>>, vector<1x1x128xf32>
    %42 = vector.shape_cast %41 : vector<1x1x128xf32> to vector<1x128xf32>
    %43 = vector.broadcast %42 : vector<1x128xf32> to vector<16x128xf32>
    %44 = arith.addf %39, %43 : vector<16x128xf32>
    %45 = arith.index_cast %c1_i32 : i32 to index
    %c0_31 = arith.constant 0 : index
    %c0_32 = arith.constant 0 : index
    %46 = vector.load %arg4[%45, %c0_31, %c0_32] : memref<3x8x128xf32, #tpu.memory_space<vmem>>, vector<1x8x128xf32>
    %47 = vector.shape_cast %46 : vector<1x8x128xf32> to vector<8x128xf32>
    %cst_33 = arith.constant dense<0.000000e+00> : vector<16x128xf32>
    %48 = tpu.matmul %2, %47, %cst_33 {dimension_numbers = #tpu.dot_dimension_numbers<[1], [0], [0], [1], [0, 0, 1, 1], [], []>} : vector<16x8xf32>, vector<8x128xf32>, vector<16x128xf32> -> vector<16x128xf32>
    %49 = arith.index_cast %c1_i32 : i32 to index
    %c0_34 = arith.constant 0 : index
    %c0_35 = arith.constant 0 : index
    %50 = vector.load %arg5[%49, %c0_34, %c0_35] : memref<3x1x128xf32, #tpu.memory_space<vmem>>, vector<1x1x128xf32>
    %51 = vector.shape_cast %50 : vector<1x1x128xf32> to vector<1x128xf32>
    %52 = vector.broadcast %51 : vector<1x128xf32> to vector<16x128xf32>
    %53 = arith.addf %48, %52 : vector<16x128xf32>
    %cst_36 = arith.constant dense<0.000000e+00> : vector<16x256xf32>
    %54 = tpu.matmul %44, %3, %cst_36 {dimension_numbers = #tpu.dot_dimension_numbers<[1], [0], [0], [1], [0, 0, 1, 1], [], []>} : vector<16x128xf32>, vector<128x256xf32>, vector<16x256xf32> -> vector<16x256xf32>
    %cst_37 = arith.constant dense<0.000000e+00> : vector<16x256xf32>
    %55 = tpu.matmul %53, %4, %cst_37 {dimension_numbers = #tpu.dot_dimension_numbers<[1], [0], [0], [1], [0, 0, 1, 1], [], []>} : vector<16x128xf32>, vector<128x256xf32>, vector<16x256xf32> -> vector<16x256xf32>
    %56 = arith.addf %54, %55 : vector<16x256xf32>
    %57 = vector.broadcast %5 : vector<1x256xf32> to vector<16x256xf32>
    %58 = arith.addf %56, %57 : vector<16x256xf32>
    %59 = math.tanh %58 : vector<16x256xf32>
    %cst_38 = arith.constant 2.000000e-01 : f32
    %60 = vector.broadcast %cst_38 : f32 to vector<16x256xf32>
    %61 = arith.mulf %60, %59 : vector<16x256xf32>
    %62 = vector.extract_strided_slice %61 {offsets = [0, 0], sizes = [16, 128], strides = [1, 1]} : vector<16x256xf32> to vector<16x128xf32>
    %63 = vector.extract_strided_slice %61 {offsets = [0, 128], sizes = [16, 128], strides = [1, 1]} : vector<16x256xf32> to vector<16x128xf32>
    %cst_39 = arith.constant 1.000000e+00 : f32
    %64 = vector.broadcast %cst_39 : f32 to vector<16x128xf32>
    %65 = arith.addf %64, %62 : vector<16x128xf32>
    %66 = arith.mulf %65, %44 : vector<16x128xf32>
    %cst_40 = arith.constant 1.000000e+00 : f32
    %67 = vector.broadcast %cst_40 : f32 to vector<16x128xf32>
    %68 = arith.addf %67, %63 : vector<16x128xf32>
    %69 = arith.mulf %68, %53 : vector<16x128xf32>
    %70 = arith.addf %66, %69 : vector<16x128xf32>
    %71 = arith.addf %70, %35 : vector<16x128xf32>
    %c2_i32 = arith.constant 2 : i32
    %cst_41 = arith.constant dense<0.000000e+00> : vector<16x128xf32>
    %72 = tpu.matmul %0, %71, %cst_41 {dimension_numbers = #tpu.dot_dimension_numbers<[1], [0], [0], [1], [0, 0, 1, 1], [], []>} : vector<16x16xf32>, vector<16x128xf32>, vector<16x128xf32> -> vector<16x128xf32>
    %73 = arith.index_cast %c2_i32 : i32 to index
    %c0_42 = arith.constant 0 : index
    %c0_43 = arith.constant 0 : index
    %74 = vector.load %arg2[%73, %c0_42, %c0_43] : memref<3x128x128xf32, #tpu.memory_space<vmem>>, vector<1x128x128xf32>
    %75 = vector.shape_cast %74 : vector<1x128x128xf32> to vector<128x128xf32>
    %cst_44 = arith.constant dense<0.000000e+00> : vector<16x128xf32>
    %76 = tpu.matmul %72, %75, %cst_44 {dimension_numbers = #tpu.dot_dimension_numbers<[1], [0], [0], [1], [0, 0, 1, 1], [], []>} : vector<16x128xf32>, vector<128x128xf32>, vector<16x128xf32> -> vector<16x128xf32>
    %77 = arith.index_cast %c2_i32 : i32 to index
    %c0_45 = arith.constant 0 : index
    %c0_46 = arith.constant 0 : index
    %78 = vector.load %arg3[%77, %c0_45, %c0_46] : memref<3x1x128xf32, #tpu.memory_space<vmem>>, vector<1x1x128xf32>
    %79 = vector.shape_cast %78 : vector<1x1x128xf32> to vector<1x128xf32>
    %80 = vector.broadcast %79 : vector<1x128xf32> to vector<16x128xf32>
    %81 = arith.addf %76, %80 : vector<16x128xf32>
    %82 = arith.index_cast %c2_i32 : i32 to index
    %c0_47 = arith.constant 0 : index
    %c0_48 = arith.constant 0 : index
    %83 = vector.load %arg4[%82, %c0_47, %c0_48] : memref<3x8x128xf32, #tpu.memory_space<vmem>>, vector<1x8x128xf32>
    %84 = vector.shape_cast %83 : vector<1x8x128xf32> to vector<8x128xf32>
    %cst_49 = arith.constant dense<0.000000e+00> : vector<16x128xf32>
    %85 = tpu.matmul %2, %84, %cst_49 {dimension_numbers = #tpu.dot_dimension_numbers<[1], [0], [0], [1], [0, 0, 1, 1], [], []>} : vector<16x8xf32>, vector<8x128xf32>, vector<16x128xf32> -> vector<16x128xf32>
    %86 = arith.index_cast %c2_i32 : i32 to index
    %c0_50 = arith.constant 0 : index
    %c0_51 = arith.constant 0 : index
    %87 = vector.load %arg5[%86, %c0_50, %c0_51] : memref<3x1x128xf32, #tpu.memory_space<vmem>>, vector<1x1x128xf32>
    %88 = vector.shape_cast %87 : vector<1x1x128xf32> to vector<1x128xf32>
    %89 = vector.broadcast %88 : vector<1x128xf32> to vector<16x128xf32>
    %90 = arith.addf %85, %89 : vector<16x128xf32>
    %cst_52 = arith.constant dense<0.000000e+00> : vector<16x256xf32>
    %91 = tpu.matmul %81, %3, %cst_52 {dimension_numbers = #tpu.dot_dimension_numbers<[1], [0], [0], [1], [0, 0, 1, 1], [], []>} : vector<16x128xf32>, vector<128x256xf32>, vector<16x256xf32> -> vector<16x256xf32>
    %cst_53 = arith.constant dense<0.000000e+00> : vector<16x256xf32>
    %92 = tpu.matmul %90, %4, %cst_53 {dimension_numbers = #tpu.dot_dimension_numbers<[1], [0], [0], [1], [0, 0, 1, 1], [], []>} : vector<16x128xf32>, vector<128x256xf32>, vector<16x256xf32> -> vector<16x256xf32>
    %93 = arith.addf %91, %92 : vector<16x256xf32>
    %94 = vector.broadcast %5 : vector<1x256xf32> to vector<16x256xf32>
    %95 = arith.addf %93, %94 : vector<16x256xf32>
    %96 = math.tanh %95 : vector<16x256xf32>
    %cst_54 = arith.constant 2.000000e-01 : f32
    %97 = vector.broadcast %cst_54 : f32 to vector<16x256xf32>
    %98 = arith.mulf %97, %96 : vector<16x256xf32>
    %99 = vector.extract_strided_slice %98 {offsets = [0, 0], sizes = [16, 128], strides = [1, 1]} : vector<16x256xf32> to vector<16x128xf32>
    %100 = vector.extract_strided_slice %98 {offsets = [0, 128], sizes = [16, 128], strides = [1, 1]} : vector<16x256xf32> to vector<16x128xf32>
    %cst_55 = arith.constant 1.000000e+00 : f32
    %101 = vector.broadcast %cst_55 : f32 to vector<16x128xf32>
    %102 = arith.addf %101, %99 : vector<16x128xf32>
    %103 = arith.mulf %102, %81 : vector<16x128xf32>
    %cst_56 = arith.constant 1.000000e+00 : f32
    %104 = vector.broadcast %cst_56 : f32 to vector<16x128xf32>
    %105 = arith.addf %104, %100 : vector<16x128xf32>
    %106 = arith.mulf %105, %90 : vector<16x128xf32>
    %107 = arith.addf %103, %106 : vector<16x128xf32>
    %108 = arith.addf %107, %72 : vector<16x128xf32>
    %c2_i32_57 = arith.constant 2 : i32
    %c0_58 = arith.constant 0 : index
    %c0_59 = arith.constant 0 : index
    %109 = vector.load %arg9[%c0_58, %c0_59] : memref<128x128xf32, #tpu.memory_space<vmem>>, vector<128x128xf32>
    %cst_60 = arith.constant dense<0.000000e+00> : vector<16x128xf32>
    %110 = tpu.matmul %108, %109, %cst_60 {dimension_numbers = #tpu.dot_dimension_numbers<[1], [0], [0], [1], [0, 0, 1, 1], [], []>} : vector<16x128xf32>, vector<128x128xf32>, vector<16x128xf32> -> vector<16x128xf32>
    %c0_61 = arith.constant 0 : index
    %c0_62 = arith.constant 0 : index
    %111 = vector.load %arg10[%c0_61, %c0_62] : memref<1x128xf32, #tpu.memory_space<vmem>>, vector<1x128xf32>
    %112 = vector.broadcast %111 : vector<1x128xf32> to vector<16x128xf32>
    %113 = arith.addf %110, %112 : vector<16x128xf32>
    %c0_63 = arith.constant 0 : index
    %c0_64 = arith.constant 0 : index
    %114 = vector.load %arg11[%c0_63, %c0_64] : memref<16x128xf32, #tpu.memory_space<vmem>>, vector<16x128xf32>
    tpu.vector_store %arg11[%c0_63, %c0_64], %113 {strides = array<i32>} : memref<16x128xf32, #tpu.memory_space<vmem>>, vector<16x128xf32>,
    return
  }
}

</mosaic_0001>

<llo_original>
// kernel: tpu_custom_call.1
$region0: #{tpu_custom_call.1}
  #allocation0 [shape = 'u32[]', space=smem, size = 0x4, offset = 0x4, fixed_abs, tag = 'smem constant byte address 0x4 - core index']
  #allocation1 [shape = 'u32[144,128]{1,0:T(1,128)}', space=vmem, size = 0x12000, scoped, tag = 'internal scratch']
  %s0 = inlined_call_operand.hbm [shape: f32[16,16], index: 0, kind: input, shape index: {}]
  %s1 = inlined_call_operand.vmem [shape: f32[16,8], index: 1, kind: input, shape index: {}]
  %s2 = inlined_call_operand.hbm [shape: f32[3,128,128], index: 2, kind: input, shape index: {}]
  %s3 = inlined_call_operand.vmem [shape: f32[3,1,128], index: 3, kind: input, shape index: {}]
  %s4 = inlined_call_operand.vmem [shape: f32[3,8,128], index: 4, kind: input, shape index: {}]
  %s5 = inlined_call_operand.vmem [shape: f32[3,1,128], index: 5, kind: input, shape index: {}]
  %s6 = inlined_call_operand.hbm [shape: f32[128,256], index: 6, kind: input, shape index: {}]
  %s7 = inlined_call_operand.hbm [shape: f32[128,256], index: 7, kind: input, shape index: {}]
  %s8 = inlined_call_operand.vmem [shape: f32[1,256], index: 8, kind: input, shape index: {}]
  %s9 = inlined_call_operand.hbm [shape: f32[128,128], index: 9, kind: input, shape index: {}]
  %s10 = inlined_call_operand.vmem [shape: f32[1,128], index: 10, kind: input, shape index: {}]
  %s11 = inlined_call_operand.hbm [shape: f32[16,128], index: 11, kind: output, shape index: {}]
  %s12 = sld [smem:[#allocation0]]
  $region74: #{tpu_custom_call.1} parent=0
    _
  %s14 = ssub.s32 1, %s12
  %s15 = scalar_select 0, %s14, %s12
  $region1: #{tpu_custom_call.1} parent=0
    #allocation2 [shape = 'u8[8192]{0}', space=vmem, size = 0x2000, scoped, tag = 'input window, operand 0, single buffered']
    #allocation3 [shape = 's32[1]{0}', space=sflag, size = 0x4, scoped, tag = 'scoped memory for tpu_custom_call.1']
    #allocation4 [shape = 's32[1]{0}', space=sflag, size = 0x4, scoped, tag = 'scoped memory for tpu_custom_call.1']
    #allocation5 [shape = 'u8[196608]{0}', space=vmem, size = 0x30000, scoped, tag = 'input window, operand 2, single buffered']
    #allocation6 [shape = 's32[1]{0}', space=sflag, size = 0x4, scoped, tag = 'scoped memory for tpu_custom_call.1']
    #allocation7 [shape = 'u8[131072]{0}', space=vmem, size = 0x20000, scoped, tag = 'input window, operand 6, single buffered']
    #allocation8 [shape = 'u8[131072]{0}', space=vmem, size = 0x20000, scoped, tag = 'input window, operand 7, single buffered']
    #allocation9 [shape = 's32[1]{0}', space=sflag, size = 0x4, scoped, tag = 'scoped memory for tpu_custom_call.1']
    #allocation10 [shape = 'u8[65536]{0}', space=vmem, size = 0x10000, scoped, tag = 'input window, operand 9, single buffered']
    #allocation11 [shape = 'u8[8192]{0}', space=vmem, size = 0x2000, scoped, tag = 'output window, operand 0, single buffered']
    %16 = vsyncpa [#allocation3], 0
    %17 = vsyncpa [#allocation6], 0
    %18 = vsyncpa [#allocation9], 0
    %19 = vsyncpa [#allocation4], 0
    // Predicated region
    $region2: #{tpu_custom_call.1} parent=1 // pred_check
      _
    $region3: #{tpu_custom_call.1} parent=1 // pred_check_branch
      %21 = sbr.rel (0) target = $region5
    $region4: #{tpu_custom_call.1} parent=1 // pred_region
      %s23 = ssub.s32 256, 256
      %24 = vsyncadd [#allocation3], %s23
      %s25 = sshll.u32 [#allocation2], 4
      %s26 = int_to_ptr.vmem [resolvable:$true] %s25
      %31 = dma.hbm_to_vmem [thread:$0]  %s0, 256, %s26, [#allocation3], 128, 128, 8
    $region5: #{tpu_custom_call.1} parent=1 // pred_fallthru
      _
    // Predicated region
    $region6: #{tpu_custom_call.1} parent=1 // pred_check
      _
    $region7: #{tpu_custom_call.1} parent=1 // pred_check_branch
      %33 = sbr.rel (0) target = $region9
    $region8: #{tpu_custom_call.1} parent=1 // pred_region
      _
    $region9: #{tpu_custom_call.1} parent=1 // pred_fallthru
      _
    // Predicated region
    $region10: #{tpu_custom_call.1} parent=1 // pred_check
      _
    $region11: #{tpu_custom_call.1} parent=1 // pred_check_branch
      %35 = sbr.rel (0) target = $region13
    $region12: #{tpu_custom_call.1} parent=1 // pred_region
      %s37 = ssub.s32 6144, 6144
      %38 = vsyncadd [#allocation6], %s37
      %s39 = sshll.u32 [#allocation5], 4
      %s40 = int_to_ptr.vmem [resolvable:$true] %s39
      %45 = dma.hbm_to_vmem [thread:$0]  %s2, 6144, %s40, [#allocation6], 128, 128, 8
    $region13: #{tpu_custom_call.1} parent=1 // pred_fallthru
      _
    // Predicated region
    $region14: #{tpu_custom_call.1} parent=1 // pred_check
      _
    $region15: #{tpu_custom_call.1} parent=1 // pred_check_branch
      %47 = sbr.rel (0) target = $region17
    $region16: #{tpu_custom_call.1} parent=1 // pred_region
      _
    $region17: #{tpu_custom_call.1} parent=1 // pred_fallthru
      _
    // Predicated region
    $region18: #{tpu_custom_call.1} parent=1 // pred_check
      _
    $region19: #{tpu_custom_call.1} parent=1 // pred_check_branch
      %49 = sbr.rel (0) target = $region21
    $region20: #{tpu_custom_call.1} parent=1 // pred_region
      _
    $region21: #{tpu_custom_call.1} parent=1 // pred_fallthru
      _
    // Predicated region
    $region22: #{tpu_custom_call.1} parent=1 // pred_check
      _
    $region23: #{tpu_custom_call.1} parent=1 // pred_check_branch
      %51 = sbr.rel (0) target = $region25
    $region24: #{tpu_custom_call.1} parent=1 // pred_region
      _
    $region25: #{tpu_custom_call.1} parent=1 // pred_fallthru
      _
    // Predicated region
    $region26: #{tpu_custom_call.1} parent=1 // pred_check
      _
    $region27: #{tpu_custom_call.1} parent=1 // pred_check_branch
      %53 = sbr.rel (0) target = $region29
    $region28: #{tpu_custom_call.1} parent=1 // pred_region
      %s55 = ssub.s32 4096, 4096
      %56 = vsyncadd [#allocation6], %s55
      %s57 = sshll.u32 [#allocation7], 4
      %s58 = int_to_ptr.vmem [resolvable:$true] %s57
      %63 = dma.hbm_to_vmem [thread:$0]  %s6, 4096, %s58, [#allocation6], 256, 256, 16
    $region29: #{tpu_custom_call.1} parent=1 // pred_fallthru
      _
    // Predicated region
    $region30: #{tpu_custom_call.1} parent=1 // pred_check
      _
    $region31: #{tpu_custom_call.1} parent=1 // pred_check_branch
      %65 = sbr.rel (0) target = $region33
    $region32: #{tpu_custom_call.1} parent=1 // pred_region
      %s67 = ssub.s32 4096, 4096
      %68 = vsyncadd [#allocation9], %s67
      %s69 = sshll.u32 [#allocation8], 4
      %s70 = int_to_ptr.vmem [resolvable:$true] %s69
      %75 = dma.hbm_to_vmem [thread:$0]  %s7, 4096, %s70, [#allocation9], 256, 256, 16
    $region33: #{tpu_custom_call.1} parent=1 // pred_fallthru
      _
    // Predicated region
    $region34: #{tpu_custom_call.1} parent=1 // pred_check
      _
    $region35: #{tpu_custom_call.1} parent=1 // pred_check_branch
      %77 = sbr.rel (0) target = $region37
    $region36: #{tpu_custom_call.1} parent=1 // pred_region
      _
    $region37: #{tpu_custom_call.1} parent=1 // pred_fallthru
      _
    // Predicated region
    $region38: #{tpu_custom_call.1} parent=1 // pred_check
      _
    $region39: #{tpu_custom_call.1} parent=1 // pred_check_branch
      %79 = sbr.rel (0) target = $region41
    $region40: #{tpu_custom_call.1} parent=1 // pred_region
      %s81 = ssub.s32 2048, 2048
      %82 = vsyncadd [#allocation9], %s81
      %s83 = sshll.u32 [#allocation10], 4
      %s84 = int_to_ptr.vmem [resolvable:$true] %s83
      %89 = dma.hbm_to_vmem [thread:$0]  %s9, 2048, %s84, [#allocation9], 128, 128, 8
    $region41: #{tpu_custom_call.1} parent=1 // pred_fallthru
      _
    // Predicated region
    $region42: #{tpu_custom_call.1} parent=1 // pred_check
      _
    $region43: #{tpu_custom_call.1} parent=1 // pred_check_branch
      %91 = sbr.rel (0) target = $region45
    $region44: #{tpu_custom_call.1} parent=1 // pred_region
      _
    $region45: #{tpu_custom_call.1} parent=1 // pred_fallthru
      _
    // Predicated region
    $region46: #{tpu_custom_call.1} parent=1 // pred_check
      _
    $region47: #{tpu_custom_call.1} parent=1 // pred_check_branch
      %93 = sbr.rel (0) target = $region49
    $region48: #{tpu_custom_call.1} parent=1 // pred_region
      %94 = dma.done [#allocation3], 256
    $region49: #{tpu_custom_call.1} parent=1 // pred_fallthru
      _
    // Predicated region
    $region50: #{tpu_custom_call.1} parent=1 // pred_check
      _
    $region51: #{tpu_custom_call.1} parent=1 // pred_check_branch
      %96 = sbr.rel (0) target = $region53
    $region52: #{tpu_custom_call.1} parent=1 // pred_region
      %97 = dma.done [#allocation6], 6144
    $region53: #{tpu_custom_call.1} parent=1 // pred_fallthru
      _
    // Predicated region
    $region54: #{tpu_custom_call.1} parent=1 // pred_check
      _
    $region55: #{tpu_custom_call.1} parent=1 // pred_check_branch
      %99 = sbr.rel (0) target = $region57
    $region56: #{tpu_custom_call.1} parent=1 // pred_region
      %100 = dma.done [#allocation6], 4096
    $region57: #{tpu_custom_call.1} parent=1 // pred_fallthru
      _
    // Predicated region
    $region58: #{tpu_custom_call.1} parent=1 // pred_check
      _
    $region59: #{tpu_custom_call.1} parent=1 // pred_check_branch
      %102 = sbr.rel (0) target = $region61
    $region60: #{tpu_custom_call.1} parent=1 // pred_region
      %103 = dma.done [#allocation9], 4096
    $region61: #{tpu_custom_call.1} parent=1 // pred_fallthru
      _
    // Predicated region
    $region62: #{tpu_custom_call.1} parent=1 // pred_check
      _
    $region63: #{tpu_custom_call.1} parent=1 // pred_check_branch
      %105 = sbr.rel (0) target = $region65
    $region64: #{tpu_custom_call.1} parent=1 // pred_region
      %106 = dma.done [#allocation9], 2048
    $region65: #{tpu_custom_call.1} parent=1 // pred_fallthru
      _
    %v107 = vld [vmem:[#allocation2] sm:$0xff]
    %v108 = vld [vmem:[#allocation2 + $0x8] sm:$0xff]
    %v109 = vld [vmem:[%s1] sm:$0xff]
    %v110 = vld [vmem:[%s1 + $0x8] sm:$0xff]
    %vm111 = vcmask 130048
    %v113 = vsel %vm111, %v107, 0
    %v116 = vsel %vm111, %v108, 0
    %118 = vmatprep.subr.mxu0 0.0
    %119 = vmatpush1.msra.mxu0 0.0
    %120 = vmatprep.subr.mxu0 0.0
    %121 = vmatpush1.msra.mxu0 0.0
    %122 = vmatprep.subr.mxu0 0.0
    %123 = vmatpush1.msra.mxu0 0.0
    %124 = vmatprep.subr.mxu0 0.0
    %125 = vmatpush1.msra.mxu0 0.0
    %126 = vmatprep.subr.mxu0 0.0
    %127 = vmatpush1.msra.mxu0 0.0
    %128 = vmatprep.subr.mxu0 0.0
    %129 = vmatpush1.msra.mxu0 0.0
    %130 = vmatprep.subr.mxu0 0.0
    %131 = vmatpush1.msra.mxu0 0.0
    %132 = vmatprep.subr.mxu0 0.0
    %133 = vmatpush1.msra.mxu0 0.0
    %134 = vmatprep.subr.mxu0 0.0
    %135 = vmatpush1.msra.mxu0 0.0
    %136 = vmatprep.subr.mxu0 0.0
    %137 = vmatpush1.msra.mxu0 0.0
    %138 = vmatprep.subr.mxu0 0.0
    %139 = vmatpush1.msra.mxu0 0.0
    %140 = vmatprep.subr.mxu0 0.0
    %141 = vmatpush1.msra.mxu0 0.0
    %142 = vmatprep.subr.mxu0 0.0
    %143 = vmatpush1.msra.mxu0 0.0
    %144 = vmatprep.subr.mxu0 0.0
    %145 = vmatpush1.msra.mxu0 0.0
    %146 = vmatprep.subr.mxu0 0.0
    %147 = vmatpush1.msra.mxu0 %v110
    %148 = vmatprep.subr.mxu0 0.0
    %149 = vmatpush1.msra.mxu0 %v109
    %150 = vmatprep.subr.mxu0 0.0
    %151 = vmatpush2.msra.mxu0 0.0
    %152 = vmatprep.subr.mxu0 0.0
    %153 = vmatpush2.msra.mxu0 0.0
    %154 = vmatprep.subr.mxu0 0.0
    %155 = vmatpush2.msra.mxu0 0.0
    %156 = vmatprep.subr.mxu0 0.0
    %157 = vmatpush2.msra.mxu0 0.0
    %158 = vmatprep.subr.mxu0 0.0
    %159 = vmatpush2.msra.mxu0 0.0
    %160 = vmatprep.subr.mxu0 0.0
    %161 = vmatpush2.msra.mxu0 0.0
    %162 = vmatprep.subr.mxu0 0.0
    %163 = vmatpush2.msra.mxu0 0.0
    %164 = vmatprep.subr.mxu0 0.0
    %165 = vmatpush2.msra.mxu0 0.0
    %166 = vmatprep.subr.mxu0 0.0
    %167 = vmatpush2.msra.mxu0 0.0
    %168 = vmatprep.subr.mxu0 0.0
    %169 = vmatpush2.msra.mxu0 0.0
    %170 = vmatprep.subr.mxu0 0.0
    %171 = vmatpush2.msra.mxu0 0.0
    %172 = vmatprep.subr.mxu0 0.0
    %173 = vmatpush2.msra.mxu0 0.0
    %174 = vmatprep.subr.mxu0 0.0
    %175 = vmatpush2.msra.mxu0 0.0
    %176 = vmatprep.subr.mxu0 0.0
    %177 = vmatpush2.msra.mxu0 0.0
    %178 = vmatprep.subr.mxu0 0.0
    %179 = vmatpush2.msra.mxu0 0.0
    %180 = vmatprep.subr.mxu0 0.0
    %181 = vmatpush2.msra.mxu0 0.0
    %182 = vmatprep.mubr.f32.mxu0 0.0
    %183 = vmatmul.mubr.f32.gmra.mxu0 %v113
    %v184 = vpop.f32.mrf.mxu0
    %v185 = vadd.f32 0.0, %v184
    %v186 = vpop.f32.mrf.mxu0
    %187 = vmatprep.mubr.f32.mxu0 0.0
    %188 = vmatmul.mubr.f32.gmra.mxu0 %v116
    %v189 = vpop.f32.mrf.mxu0
    %v190 = vadd.f32 0.0, %v189
    %v191 = vpop.f32.mrf.mxu0
    %192 = vdwg.mxu0
    %v193 = vld [vmem:[#allocation7] sm:$0xff]
    %v194 = vld [vmem:[#allocation7 + $0x8] sm:$0xff]
    %v195 = vld [vmem:[#allocation7 + $0x10] sm:$0xff]
    %v196 = vld [vmem:[#allocation7 + $0x18] sm:$0xff]
    %v197 = vld [vmem:[#allocation7 + $0x20] sm:$0xff]
    %v198 = vld [vmem:[#allocation7 + $0x28] sm:$0xff]
    %v199 = vld [vmem:[#allocation7 + $0x30] sm:$0xff]
    %v200 = vld [vmem:[#allocation7 + $0x38] sm:$0xff]
    %v201 = vld [vmem:[#allocation7 + $0x40] sm:$0xff]
    %v202 = vld [vmem:[#allocation7 + $0x48] sm:$0xff]
    %v203 = vld [vmem:[#allocation7 + $0x50] sm:$0xff]
    %v204 = vld [vmem:[#allocation7 + $0x58] sm:$0xff]
    %v205 = vld [vmem:[#allocation7 + $0x60] sm:$0xff]
    %v206 = vld [vmem:[#allocation7 + $0x68] sm:$0xff]
    %v207 = vld [vmem:[#allocation7 + $0x70] sm:$0xff]
    %v208 = vld [vmem:[#allocation7 + $0x78] sm:$0xff]
    %v209 = vld [vmem:[#allocation7 + $0x80] sm:$0xff]
    %v210 = vld [vmem:[#allocation7 + $0x88] sm:$0xff]
    %v211 = vld [vmem:[#allocation7 + $0x90] sm:$0xff]
    %v212 = vld [vmem:[#allocation7 + $0x98] sm:$0xff]
    %v213 = vld [vmem:[#allocation7 + $0xa0] sm:$0xff]
    %v214 = vld [vmem:[#allocation7 + $0xa8] sm:$0xff]
    %v215 = vld [vmem:[#allocation7 + $0xb0] sm:$0xff]
    %v216 = vld [vmem:[#allocation7 + $0xb8] sm:$0xff]
    %v217 = vld [vmem:[#allocation7 + $0xc0] sm:$0xff]
    %v218 = vld [vmem:[#allocation7 + $0xc8] sm:$0xff]
    %v219 = vld [vmem:[#allocation7 + $0xd0] sm:$0xff]
    %v220 = vld [vmem:[#allocation7 + $0xd8] sm:$0xff]
    %v221 = vld [vmem:[#allocation7 + $0xe0] sm:$0xff]
    %v222 = vld [vmem:[#allocation7 + $0xe8] sm:$0xff]
    %v223 = vld [vmem:[#allocation7 + $0xf0] sm:$0xff]
    %v224 = vld [vmem:[#allocation7 + $0xf8] sm:$0xff]
    %v225 = vld [vmem:[#allocation8] sm:$0xff]
    %v226 = vld [vmem:[#allocation8 + $0x8] sm:$0xff]
    %v227 = vld [vmem:[#allocation8 + $0x10] sm:$0xff]
    %v228 = vld [vmem:[#allocation8 + $0x18] sm:$0xff]
    %v229 = vld [vmem:[#allocation8 + $0x20] sm:$0xff]
    %v230 = vld [vmem:[#allocation8 + $0x28] sm:$0xff]
    %v231 = vld [vmem:[#allocation8 + $0x30] sm:$0xff]
    %v232 = vld [vmem:[#allocation8 + $0x38] sm:$0xff]
    %v233 = vld [vmem:[#allocation8 + $0x40] sm:$0xff]
    %v234 = vld [vmem:[#allocation8 + $0x48] sm:$0xff]
    %v235 = vld [vmem:[#allocation8 + $0x50] sm:$0xff]
    %v236 = vld [vmem:[#allocation8 + $0x58] sm:$0xff]
    %v237 = vld [vmem:[#allocation8 + $0x60] sm:$0xff]
    %v238 = vld [vmem:[#allocation8 + $0x68] sm:$0xff]
    %v239 = vld [vmem:[#allocation8 + $0x70] sm:$0xff]
    %v240 = vld [vmem:[#allocation8 + $0x78] sm:$0xff]
    %v241 = vld [vmem:[#allocation8 + $0x80] sm:$0xff]
    %v242 = vld [vmem:[#allocation8 + $0x88] sm:$0xff]
    %v243 = vld [vmem:[#allocation8 + $0x90] sm:$0xff]
    %v244 = vld [vmem:[#allocation8 + $0x98] sm:$0xff]
    %v245 = vld [vmem:[#allocation8 + $0xa0] sm:$0xff]
    %v246 = vld [vmem:[#allocation8 + $0xa8] sm:$0xff]
    %v247 = vld [vmem:[#allocation8 + $0xb0] sm:$0xff]
    %v248 = vld [vmem:[#allocation8 + $0xb8] sm:$0xff]
    %v249 = vld [vmem:[#allocation8 + $0xc0] sm:$0xff]
    %v250 = vld [vmem:[#allocation8 + $0xc8] sm:$0xff]
    %v251 = vld [vmem:[#allocation8 + $0xd0] sm:$0xff]
    %v252 = vld [vmem:[#allocation8 + $0xd8] sm:$0xff]
    %v253 = vld [vmem:[#allocation8 + $0xe0] sm:$0xff]
    %v254 = vld [vmem:[#allocation8 + $0xe8] sm:$0xff]
    %v255 = vld [vmem:[#allocation8 + $0xf0] sm:$0xff]
    %v256 = vld [vmem:[#allocation8 + $0xf8] sm:$0xff]
    %v257 = vld [vmem:[%s8] sm:$0x3]
    %v258 = vld [vmem:[%s3] sm:$0x1]
    %v260 = vlaneseq
    %v261 = vshrl.u32 %v260, 7
    %v262 = vsub.s32 0, %v261
    %v263 = vrot.slane %v258, %v262
    %v265 = vadd.f32 %v263, 0.0
    %v266 = vld [vmem:[%s4] sm:$0xff]
    %v267 = vld [vmem:[%s5] sm:$0x1]
    %v269 = vlaneseq
    %v270 = vshrl.u32 %v269, 7
    %v271 = vsub.s32 0, %v270
    %v272 = vrot.slane %v267, %v271
    %vm274 = vcmask 64512
    %v276 = vsel %vm274, %v185, 0
    %v279 = vsel %vm274, %v190, 0
    %281 = vmatprep.subr.mxu0 0.0
    %282 = vmatpush1.msra.mxu0 0.0
    %283 = vmatprep.subr.mxu0 0.0
    %284 = vmatpush1.msra.mxu0 0.0
    %285 = vmatprep.subr.mxu0 0.0
    %286 = vmatpush1.msra.mxu0 0.0
    %287 = vmatprep.subr.mxu0 0.0
    %288 = vmatpush1.msra.mxu0 0.0
    %289 = vmatprep.subr.mxu0 0.0
    %290 = vmatpush1.msra.mxu0 0.0
    %291 = vmatprep.subr.mxu0 0.0
    %292 = vmatpush1.msra.mxu0 0.0
    %293 = vmatprep.subr.mxu0 0.0
    %294 = vmatpush1.msra.mxu0 0.0
    %295 = vmatprep.subr.mxu0 0.0
    %296 = vmatpush1.msra.mxu0 0.0
    %297 = vmatprep.subr.mxu0 0.0
    %298 = vmatpush1.msra.mxu0 0.0
    %299 = vmatprep.subr.mxu0 0.0
    %300 = vmatpush1.msra.mxu0 0.0
    %301 = vmatprep.subr.mxu0 0.0
    %302 = vmatpush1.msra.mxu0 0.0
    %303 = vmatprep.subr.mxu0 0.0
    %304 = vmatpush1.msra.mxu0 0.0
    %305 = vmatprep.subr.mxu0 0.0
    %306 = vmatpush1.msra.mxu0 0.0
    %307 = vmatprep.subr.mxu0 0.0
    %308 = vmatpush1.msra.mxu0 0.0
    %309 = vmatprep.subr.mxu0 0.0
    %310 = vmatpush1.msra.mxu0 0.0
    %311 = vmatprep.subr.mxu0 0.0
    %312 = vmatpush1.msra.mxu0 %v266
    %313 = vmatprep.subr.mxu0 0.0
    %314 = vmatpush2.msra.mxu0 0.0
    %315 = vmatprep.subr.mxu0 0.0
    %316 = vmatpush2.msra.mxu0 0.0
    %317 = vmatprep.subr.mxu0 0.0
    %318 = vmatpush2.msra.mxu0 0.0
    %319 = vmatprep.subr.mxu0 0.0
    %320 = vmatpush2.msra.mxu0 0.0
    %321 = vmatprep.subr.mxu0 0.0
    %322 = vmatpush2.msra.mxu0 0.0
    %323 = vmatprep.subr.mxu0 0.0
    %324 = vmatpush2.msra.mxu0 0.0
    %325 = vmatprep.subr.mxu0 0.0
    %326 = vmatpush2.msra.mxu0 0.0
    %327 = vmatprep.subr.mxu0 0.0
    %328 = vmatpush2.msra.mxu0 0.0
    %329 = vmatprep.subr.mxu0 0.0
    %330 = vmatpush2.msra.mxu0 0.0
    %331 = vmatprep.subr.mxu0 0.0
    %332 = vmatpush2.msra.mxu0 0.0
    %333 = vmatprep.subr.mxu0 0.0
    %334 = vmatpush2.msra.mxu0 0.0
    %335 = vmatprep.subr.mxu0 0.0
    %336 = vmatpush2.msra.mxu0 0.0
    %337 = vmatprep.subr.mxu0 0.0
    %338 = vmatpush2.msra.mxu0 0.0
    %339 = vmatprep.subr.mxu0 0.0
    %340 = vmatpush2.msra.mxu0 0.0
    %341 = vmatprep.subr.mxu0 0.0
    %342 = vmatpush2.msra.mxu0 0.0
    %343 = vmatprep.subr.mxu0 0.0
    %344 = vmatpush2.msra.mxu0 0.0
    %345 = vmatprep.mubr.f32.mxu0 0.0
    %346 = vmatmul.mubr.f32.gmra.mxu0 %v276
    %v347 = vpop.f32.mrf.mxu0
    %v348 = vadd.f32 %v272, %v347
    %v349 = vpop.f32.mrf.mxu0
    %350 = vmatprep.mubr.f32.mxu0 0.0
    %351 = vmatmul.mubr.f32.gmra.mxu0 %v279
    %v352 = vpop.f32.mrf.mxu0
    %v353 = vadd.f32 %v272, %v352
    %v354 = vpop.f32.mrf.mxu0
    %355 = vdwg.mxu0
    %356 = vmatprep.subr.mxu0 %v256
    %357 = vmatpush1.msra.mxu0 %v255
    %358 = vmatprep.subr.mxu0 %v254
    %359 = vmatpush1.msra.mxu0 %v253
    %360 = vmatprep.subr.mxu0 %v252
    %361 = vmatpush1.msra.mxu0 %v251
    %362 = vmatprep.subr.mxu0 %v250
    %363 = vmatpush1.msra.mxu0 %v249
    %364 = vmatprep.subr.mxu0 %v248
    %365 = vmatpush1.msra.mxu0 %v247
    %366 = vmatprep.subr.mxu0 %v246
    %367 = vmatpush1.msra.mxu0 %v245
    %368 = vmatprep.subr.mxu0 %v244
    %369 = vmatpush1.msra.mxu0 %v243
    %370 = vmatprep.subr.mxu0 %v242
    %371 = vmatpush1.msra.mxu0 %v241
    %372 = vmatprep.subr.mxu0 %v240
    %373 = vmatpush1.msra.mxu0 %v239
    %374 = vmatprep.subr.mxu0 %v238
    %375 = vmatpush1.msra.mxu0 %v237
    %376 = vmatprep.subr.mxu0 %v236
    %377 = vmatpush1.msra.mxu0 %v235
    %378 = vmatprep.subr.mxu0 %v234
    %379 = vmatpush1.msra.mxu0 %v233
    %380 = vmatprep.subr.mxu0 %v232
    %381 = vmatpush1.msra.mxu0 %v231
    %382 = vmatprep.subr.mxu0 %v230
    %383 = vmatpush1.msra.mxu0 %v229
    %384 = vmatprep.subr.mxu0 %v228
    %385 = vmatpush1.msra.mxu0 %v227
    %386 = vmatprep.subr.mxu0 %v226
    %387 = vmatpush1.msra.mxu0 %v225
    %388 = vmatprep.subr.mxu0 0.0
    %389 = vmatpush2.msra.mxu0 0.0
    %390 = vmatprep.subr.mxu0 0.0
    %391 = vmatpush2.msra.mxu0 0.0
    %392 = vmatprep.subr.mxu0 0.0
    %393 = vmatpush2.msra.mxu0 0.0
    %394 = vmatprep.subr.mxu0 0.0
    %395 = vmatpush2.msra.mxu0 0.0
    %396 = vmatprep.subr.mxu0 0.0
    %397 = vmatpush2.msra.mxu0 0.0
    %398 = vmatprep.subr.mxu0 0.0
    %399 = vmatpush2.msra.mxu0 0.0
    %400 = vmatprep.subr.mxu0 0.0
    %401 = vmatpush2.msra.mxu0 0.0
    %402 = vmatprep.subr.mxu0 0.0
    %403 = vmatpush2.msra.mxu0 0.0
    %404 = vmatprep.subr.mxu0 0.0
    %405 = vmatpush2.msra.mxu0 0.0
    %406 = vmatprep.subr.mxu0 0.0
    %407 = vmatpush2.msra.mxu0 0.0
    %408 = vmatprep.subr.mxu0 0.0
    %409 = vmatpush2.msra.mxu0 0.0
    %410 = vmatprep.subr.mxu0 0.0
    %411 = vmatpush2.msra.mxu0 0.0
    %412 = vmatprep.subr.mxu0 0.0
    %413 = vmatpush2.msra.mxu0 0.0
    %414 = vmatprep.subr.mxu0 0.0
    %415 = vmatpush2.msra.mxu0 0.0
    %416 = vmatprep.subr.mxu0 0.0
    %417 = vmatpush2.msra.mxu0 0.0
    %418 = vmatprep.subr.mxu0 0.0
    %419 = vmatpush2.msra.mxu0 0.0
    %420 = vmatprep.mubr.f32.mxu0 0.0
    %421 = vmatmul.mubr.f32.gmra.mxu0 %v348
    %v422 = vpop.f32.mrf.mxu0
    %v423 = vadd.f32 0.0, %v422
    %v424 = vpop.f32.mrf.mxu0
    %v425 = vadd.f32 0.0, %v424
    %426 = vmatprep.mubr.f32.mxu0 0.0
    %427 = vmatmul.mubr.f32.gmra.mxu0 %v353
    %v428 = vpop.f32.mrf.mxu0
    %v429 = vadd.f32 0.0, %v428
    %v430 = vpop.f32.mrf.mxu0
    %v431 = vadd.f32 0.0, %v430
    %432 = vdwg.mxu0
    %433 = vmatprep.subr.mxu0 %v224
    %434 = vmatpush1.msra.mxu0 %v223
    %435 = vmatprep.subr.mxu0 %v222
    %436 = vmatpush1.msra.mxu0 %v221
    %437 = vmatprep.subr.mxu0 %v220
    %438 = vmatpush1.msra.mxu0 %v219
    %439 = vmatprep.subr.mxu0 %v218
    %440 = vmatpush1.msra.mxu0 %v217
    %441 = vmatprep.subr.mxu0 %v216
    %442 = vmatpush1.msra.mxu0 %v215
    %443 = vmatprep.subr.mxu0 %v214
    %444 = vmatpush1.msra.mxu0 %v213
    %445 = vmatprep.subr.mxu0 %v212
    %446 = vmatpush1.msra.mxu0 %v211
    %447 = vmatprep.subr.mxu0 %v210
    %448 = vmatpush1.msra.mxu0 %v209
    %449 = vmatprep.subr.mxu0 %v208
    %450 = vmatpush1.msra.mxu0 %v207
    %451 = vmatprep.subr.mxu0 %v206
    %452 = vmatpush1.msra.mxu0 %v205
    %453 = vmatprep.subr.mxu0 %v204
    %454 = vmatpush1.msra.mxu0 %v203
    %455 = vmatprep.subr.mxu0 %v202
    %456 = vmatpush1.msra.mxu0 %v201
    %457 = vmatprep.subr.mxu0 %v200
    %458 = vmatpush1.msra.mxu0 %v199
    %459 = vmatprep.subr.mxu0 %v198
    %460 = vmatpush1.msra.mxu0 %v197
    %461 = vmatprep.subr.mxu0 %v196
    %462 = vmatpush1.msra.mxu0 %v195
    %463 = vmatprep.subr.mxu0 %v194
    %464 = vmatpush1.msra.mxu0 %v193
    %465 = vmatprep.subr.mxu0 0.0
    %466 = vmatpush2.msra.mxu0 0.0
    %467 = vmatprep.subr.mxu0 0.0
    %468 = vmatpush2.msra.mxu0 0.0
    %469 = vmatprep.subr.mxu0 0.0
    %470 = vmatpush2.msra.mxu0 0.0
    %471 = vmatprep.subr.mxu0 0.0
    %472 = vmatpush2.msra.mxu0 0.0
    %473 = vmatprep.subr.mxu0 0.0
    %474 = vmatpush2.msra.mxu0 0.0
    %475 = vmatprep.subr.mxu0 0.0
    %476 = vmatpush2.msra.mxu0 0.0
    %477 = vmatprep.subr.mxu0 0.0
    %478 = vmatpush2.msra.mxu0 0.0
    %479 = vmatprep.subr.mxu0 0.0
    %480 = vmatpush2.msra.mxu0 0.0
    %481 = vmatprep.subr.mxu0 0.0
    %482 = vmatpush2.msra.mxu0 0.0
    %483 = vmatprep.subr.mxu0 0.0
    %484 = vmatpush2.msra.mxu0 0.0
    %485 = vmatprep.subr.mxu0 0.0
    %486 = vmatpush2.msra.mxu0 0.0
    %487 = vmatprep.subr.mxu0 0.0
    %488 = vmatpush2.msra.mxu0 0.0
    %489 = vmatprep.subr.mxu0 0.0
    %490 = vmatpush2.msra.mxu0 0.0
    %491 = vmatprep.subr.mxu0 0.0
    %492 = vmatpush2.msra.mxu0 0.0
    %493 = vmatprep.subr.mxu0 0.0
    %494 = vmatpush2.msra.mxu0 0.0
    %495 = vmatprep.subr.mxu0 0.0
    %496 = vmatpush2.msra.mxu0 0.0
    %497 = vmatprep.mubr.f32.mxu0 0.0
    %498 = vmatmul.mubr.f32.gmra.mxu0 %v265
    %v499 = vpop.f32.mrf.mxu0
    %v500 = vadd.f32 %v423, %v499
    %v501 = vpop.f32.mrf.mxu0
    %v502 = vadd.f32 %v425, %v501
    %503 = vmatprep.mubr.f32.mxu0 0.0
    %504 = vmatmul.mubr.f32.gmra.mxu0 %v265
    %v505 = vpop.f32.mrf.mxu0
    %v506 = vadd.f32 %v429, %v505
    %v507 = vpop.f32.mrf.mxu0
    %v508 = vadd.f32 %v431, %v507
    %509 = vdwg.mxu0
    %v511 = vlaneseq
    %v512 = vshrl.u32 %v511, 7
    %v513 = vsub.s32 0, %v512
    %v514 = vrot.slane %v257, %v513
    %v515 = vlaneseq
    %v516 = vshrl.u32 %v515, 7
    %v517 = vsub.s32 1, %v516
    %v518 = vrot.slane %v257, %v517
    %v521 = vadd.f32 %v500, %v514
    %v522 = vadd.f32 %v502, %v518
    %v523 = vadd.f32 %v506, %v514
    %v524 = vadd.f32 %v508, %v518
    %v525 = vtanh.pop %v521
    %v526 = vtanh.pop %v522
    %v527 = vtanh.pop %v523
    %v528 = vtanh.pop %v524
    %v529 = vmul.f32 %v525, 0.2
    %v530 = vmul.f32 %v526, 0.2
    %v531 = vmul.f32 %v527, 0.2
    %v532 = vmul.f32 %v528, 0.2
    %v533 = vadd.f32 %v529, 1.0
    %v534 = vadd.f32 %v531, 1.0
    %v535 = vmul.f32 %v533, %v265
    %v536 = vmul.f32 %v534, %v265
    %v537 = vadd.f32 %v530, 1.0
    %v538 = vadd.f32 %v532, 1.0
    %v539 = vmul.f32 %v537, %v348
    %v540 = vmul.f32 %v538, %v353
    %v541 = vadd.f32 %v535, %v539
    %v542 = vadd.f32 %v536, %v540
    %543 = vmatprep.subr.mxu0 0.0
    %544 = vmatpush1.msra.mxu0 0.0
    %545 = vmatprep.subr.mxu0 0.0
    %546 = vmatpush1.msra.mxu0 0.0
    %547 = vmatprep.subr.mxu0 0.0
    %548 = vmatpush1.msra.mxu0 0.0
    %549 = vmatprep.subr.mxu0 0.0
    %550 = vmatpush1.msra.mxu0 0.0
    %551 = vmatprep.subr.mxu0 0.0
    %552 = vmatpush1.msra.mxu0 0.0
    %553 = vmatprep.subr.mxu0 0.0
    %554 = vmatpush1.msra.mxu0 0.0
    %555 = vmatprep.subr.mxu0 0.0
    %556 = vmatpush1.msra.mxu0 0.0
    %557 = vmatprep.subr.mxu0 0.0
    %558 = vmatpush1.msra.mxu0 0.0
    %559 = vmatprep.subr.mxu0 0.0
    %560 = vmatpush1.msra.mxu0 0.0
    %561 = vmatprep.subr.mxu0 0.0
    %562 = vmatpush1.msra.mxu0 0.0
    %563 = vmatprep.subr.mxu0 0.0
    %564 = vmatpush1.msra.mxu0 0.0
    %565 = vmatprep.subr.mxu0 0.0
    %566 = vmatpush1.msra.mxu0 0.0
    %567 = vmatprep.subr.mxu0 0.0
    %568 = vmatpush1.msra.mxu0 0.0
    %569 = vmatprep.subr.mxu0 0.0
    %570 = vmatpush1.msra.mxu0 0.0
    %571 = vmatprep.subr.mxu0 0.0
    %572 = vmatpush1.msra.mxu0 %v542
    %573 = vmatprep.subr.mxu0 0.0
    %574 = vmatpush1.msra.mxu0 %v541
    %575 = vmatprep.subr.mxu0 0.0
    %576 = vmatpush2.msra.mxu0 0.0
    %577 = vmatprep.subr.mxu0 0.0
    %578 = vmatpush2.msra.mxu0 0.0
    %579 = vmatprep.subr.mxu0 0.0
    %580 = vmatpush2.msra.mxu0 0.0
    %581 = vmatprep.subr.mxu0 0.0
    %582 = vmatpush2.msra.mxu0 0.0
    %583 = vmatprep.subr.mxu0 0.0
    %584 = vmatpush2.msra.mxu0 0.0
    %585 = vmatprep.subr.mxu0 0.0
    %586 = vmatpush2.msra.mxu0 0.0
    %587 = vmatprep.subr.mxu0 0.0
    %588 = vmatpush2.msra.mxu0 0.0
    %589 = vmatprep.subr.mxu0 0.0
    %590 = vmatpush2.msra.mxu0 0.0
    %591 = vmatprep.subr.mxu0 0.0
    %592 = vmatpush2.msra.mxu0 0.0
    %593 = vmatprep.subr.mxu0 0.0
    %594 = vmatpush2.msra.mxu0 0.0
    %595 = vmatprep.subr.mxu0 0.0
    %596 = vmatpush2.msra.mxu0 0.0
    %597 = vmatprep.subr.mxu0 0.0
    %598 = vmatpush2.msra.mxu0 0.0
    %599 = vmatprep.subr.mxu0 0.0
    %600 = vmatpush2.msra.mxu0 0.0
    %601 = vmatprep.subr.mxu0 0.0
    %602 = vmatpush2.msra.mxu0 0.0
    %603 = vmatprep.subr.mxu0 0.0
    %604 = vmatpush2.msra.mxu0 0.0
    %605 = vmatprep.subr.mxu0 0.0
    %606 = vmatpush2.msra.mxu0 0.0
    %607 = vmatprep.mubr.f32.mxu0 0.0
    %608 = vmatmul.mubr.f32.gmra.mxu0 %v113
    %v609 = vpop.f32.mrf.mxu0
    %v610 = vadd.f32 0.0, %v609
    %v611 = vpop.f32.mrf.mxu0
    %612 = vmatprep.mubr.f32.mxu0 0.0
    %613 = vmatmul.mubr.f32.gmra.mxu0 %v116
    %v614 = vpop.f32.mrf.mxu0
    %v615 = vadd.f32 0.0, %v614
    %v616 = vpop.f32.mrf.mxu0
    %617 = vdwg.mxu0
    %s618 = scalar_lea.vmem [#allocation5], 128
    %v619 = vld [vmem:[%s618] sm:$0xff]
    %v620 = vld [vmem:[%s618 + $0x8] sm:$0xff]
    %v621 = vld [vmem:[%s618 + $0x10] sm:$0xff]
    %v622 = vld [vmem:[%s618 + $0x18] sm:$0xff]
    %v623 = vld [vmem:[%s618 + $0x20] sm:$0xff]
    %v624 = vld [vmem:[%s618 + $0x28] sm:$0xff]
    %v625 = vld [vmem:[%s618 + $0x30] sm:$0xff]
    %v626 = vld [vmem:[%s618 + $0x38] sm:$0xff]
    %v627 = vld [vmem:[%s618 + $0x40] sm:$0xff]
    %v628 = vld [vmem:[%s618 + $0x48] sm:$0xff]
    %v629 = vld [vmem:[%s618 + $0x50] sm:$0xff]
    %v630 = vld [vmem:[%s618 + $0x58] sm:$0xff]
    %v631 = vld [vmem:[%s618 + $0x60] sm:$0xff]
    %v632 = vld [vmem:[%s618 + $0x68] sm:$0xff]
    %v633 = vld [vmem:[%s618 + $0x70] sm:$0xff]
    %v634 = vld [vmem:[%s618 + $0x78] sm:$0xff]
    %s635 = scalar_lea.vmem %s3, 1
    %v636 = vld [vmem:[%s635] sm:$0x1]
    %v638 = vlaneseq
    %v639 = vshrl.u32 %v638, 7
    %v640 = vsub.s32 0, %v639
    %v641 = vrot.slane %v636, %v640
    %643 = vmatprep.subr.mxu0 0.0
    %644 = vmatpush1.msra.mxu0 %v634
    %645 = vmatprep.subr.mxu0 0.0
    %646 = vmatpush1.msra.mxu0 %v633
    %647 = vmatprep.subr.mxu0 0.0
    %648 = vmatpush1.msra.mxu0 %v632
    %649 = vmatprep.subr.mxu0 0.0
    %650 = vmatpush1.msra.mxu0 %v631
    %651 = vmatprep.subr.mxu0 0.0
    %652 = vmatpush1.msra.mxu0 %v630
    %653 = vmatprep.subr.mxu0 0.0
    %654 = vmatpush1.msra.mxu0 %v629
    %655 = vmatprep.subr.mxu0 0.0
    %656 = vmatpush1.msra.mxu0 %v628
    %657 = vmatprep.subr.mxu0 0.0
    %658 = vmatpush1.msra.mxu0 %v627
    %659 = vmatprep.subr.mxu0 0.0
    %660 = vmatpush1.msra.mxu0 %v626
    %661 = vmatprep.subr.mxu0 0.0
    %662 = vmatpush1.msra.mxu0 %v625
    %663 = vmatprep.subr.mxu0 0.0
    %664 = vmatpush1.msra.mxu0 %v624
    %665 = vmatprep.subr.mxu0 0.0
    %666 = vmatpush1.msra.mxu0 %v623
    %667 = vmatprep.subr.mxu0 0.0
    %668 = vmatpush1.msra.mxu0 %v622
    %669 = vmatprep.subr.mxu0 0.0
    %670 = vmatpush1.msra.mxu0 %v621
    %671 = vmatprep.subr.mxu0 0.0
    %672 = vmatpush1.msra.mxu0 %v620
    %673 = vmatprep.subr.mxu0 0.0
    %674 = vmatpush1.msra.mxu0 %v619
    %675 = vmatprep.subr.mxu0 0.0
    %676 = vmatpush2.msra.mxu0 0.0
    %677 = vmatprep.subr.mxu0 0.0
    %678 = vmatpush2.msra.mxu0 0.0
    %679 = vmatprep.subr.mxu0 0.0
    %680 = vmatpush2.msra.mxu0 0.0
    %681 = vmatprep.subr.mxu0 0.0
    %682 = vmatpush2.msra.mxu0 0.0
    %683 = vmatprep.subr.mxu0 0.0
    %684 = vmatpush2.msra.mxu0 0.0
    %685 = vmatprep.subr.mxu0 0.0
    %686 = vmatpush2.msra.mxu0 0.0
    %687 = vmatprep.subr.mxu0 0.0
    %688 = vmatpush2.msra.mxu0 0.0
    %689 = vmatprep.subr.mxu0 0.0
    %690 = vmatpush2.msra.mxu0 0.0
    %691 = vmatprep.subr.mxu0 0.0
    %692 = vmatpush2.msra.mxu0 0.0
    %693 = vmatprep.subr.mxu0 0.0
    %694 = vmatpush2.msra.mxu0 0.0
    %695 = vmatprep.subr.mxu0 0.0
    %696 = vmatpush2.msra.mxu0 0.0
    %697 = vmatprep.subr.mxu0 0.0
    %698 = vmatpush2.msra.mxu0 0.0
    %699 = vmatprep.subr.mxu0 0.0
    %700 = vmatpush2.msra.mxu0 0.0
    %701 = vmatprep.subr.mxu0 0.0
    %702 = vmatpush2.msra.mxu0 0.0
    %703 = vmatprep.subr.mxu0 0.0
    %704 = vmatpush2.msra.mxu0 0.0
    %705 = vmatprep.subr.mxu0 0.0
    %706 = vmatpush2.msra.mxu0 0.0
    %707 = vmatprep.mubr.f32.mxu0 0.0
    %708 = vmatmul.mubr.f32.gmra.mxu0 %v610
    %v709 = vpop.f32.mrf.mxu0
    %v710 = vadd.f32 %v641, %v709
    %v711 = vpop.f32.mrf.mxu0
    %712 = vmatprep.mubr.f32.mxu0 0.0
    %713 = vmatmul.mubr.f32.gmra.mxu0 %v615
    %v714 = vpop.f32.mrf.mxu0
    %v715 = vadd.f32 %v641, %v714
    %v716 = vpop.f32.mrf.mxu0
    %717 = vdwg.mxu0
    %s718 = scalar_lea.vmem %s4, 8
    %v719 = vld [vmem:[%s718] sm:$0xff]
    %s720 = scalar_lea.vmem %s5, 1
    %v721 = vld [vmem:[%s720] sm:$0x1]
    %v723 = vlaneseq
    %v724 = vshrl.u32 %v723, 7
    %v725 = vsub.s32 0, %v724
    %v726 = vrot.slane %v721, %v725
    %728 = vmatprep.subr.mxu0 0.0
    %729 = vmatpush1.msra.mxu0 0.0
    %730 = vmatprep.subr.mxu0 0.0
    %731 = vmatpush1.msra.mxu0 0.0
    %732 = vmatprep.subr.mxu0 0.0
    %733 = vmatpush1.msra.mxu0 0.0
    %734 = vmatprep.subr.mxu0 0.0
    %735 = vmatpush1.msra.mxu0 0.0
    %736 = vmatprep.subr.mxu0 0.0
    %737 = vmatpush1.msra.mxu0 0.0
    %738 = vmatprep.subr.mxu0 0.0
    %739 = vmatpush1.msra.mxu0 0.0
    %740 = vmatprep.subr.mxu0 0.0
    %741 = vmatpush1.msra.mxu0 0.0
    %742 = vmatprep.subr.mxu0 0.0
    %743 = vmatpush1.msra.mxu0 0.0
    %744 = vmatprep.subr.mxu0 0.0
    %745 = vmatpush1.msra.mxu0 0.0
    %746 = vmatprep.subr.mxu0 0.0
    %747 = vmatpush1.msra.mxu0 0.0
    %748 = vmatprep.subr.mxu0 0.0
    %749 = vmatpush1.msra.mxu0 0.0
    %750 = vmatprep.subr.mxu0 0.0
    %751 = vmatpush1.msra.mxu0 0.0
    %752 = vmatprep.subr.mxu0 0.0
    %753 = vmatpush1.msra.mxu0 0.0
    %754 = vmatprep.subr.mxu0 0.0
    %755 = vmatpush1.msra.mxu0 0.0
    %756 = vmatprep.subr.mxu0 0.0
    %757 = vmatpush1.msra.mxu0 0.0
    %758 = vmatprep.subr.mxu0 0.0
    %759 = vmatpush1.msra.mxu0 %v719
    %760 = vmatprep.subr.mxu0 0.0
    %761 = vmatpush2.msra.mxu0 0.0
    %762 = vmatprep.subr.mxu0 0.0
    %763 = vmatpush2.msra.mxu0 0.0
    %764 = vmatprep.subr.mxu0 0.0
    %765 = vmatpush2.msra.mxu0 0.0
    %766 = vmatprep.subr.mxu0 0.0
    %767 = vmatpush2.msra.mxu0 0.0
    %768 = vmatprep.subr.mxu0 0.0
    %769 = vmatpush2.msra.mxu0 0.0
    %770 = vmatprep.subr.mxu0 0.0
    %771 = vmatpush2.msra.mxu0 0.0
    %772 = vmatprep.subr.mxu0 0.0
    %773 = vmatpush2.msra.mxu0 0.0
    %774 = vmatprep.subr.mxu0 0.0
    %775 = vmatpush2.msra.mxu0 0.0
    %776 = vmatprep.subr.mxu0 0.0
    %777 = vmatpush2.msra.mxu0 0.0
    %778 = vmatprep.subr.mxu0 0.0
    %779 = vmatpush2.msra.mxu0 0.0
    %780 = vmatprep.subr.mxu0 0.0
    %781 = vmatpush2.msra.mxu0 0.0
    %782 = vmatprep.subr.mxu0 0.0
    %783 = vmatpush2.msra.mxu0 0.0
    %784 = vmatprep.subr.mxu0 0.0
    %785 = vmatpush2.msra.mxu0 0.0
    %786 = vmatprep.subr.mxu0 0.0
    %787 = vmatpush2.msra.mxu0 0.0
    %788 = vmatprep.subr.mxu0 0.0
    %789 = vmatpush2.msra.mxu0 0.0
    %790 = vmatprep.subr.mxu0 0.0
    %791 = vmatpush2.msra.mxu0 0.0
    %792 = vmatprep.mubr.f32.mxu0 0.0
    %793 = vmatmul.mubr.f32.gmra.mxu0 %v276
    %v794 = vpop.f32.mrf.mxu0
    %v795 = vadd.f32 %v726, %v794
    %v796 = vpop.f32.mrf.mxu0
    %797 = vmatprep.mubr.f32.mxu0 0.0
    %798 = vmatmul.mubr.f32.gmra.mxu0 %v279
    %v799 = vpop.f32.mrf.mxu0
    %v800 = vadd.f32 %v726, %v799
    %v801 = vpop.f32.mrf.mxu0
    %802 = vdwg.mxu0
    %803 = vmatprep.subr.mxu0 %v256
    %804 = vmatpush1.msra.mxu0 %v255
    %805 = vmatprep.subr.mxu0 %v254
    %806 = vmatpush1.msra.mxu0 %v253
    %807 = vmatprep.subr.mxu0 %v252
    %808 = vmatpush1.msra.mxu0 %v251
    %809 = vmatprep.subr.mxu0 %v250
    %810 = vmatpush1.msra.mxu0 %v249
    %811 = vmatprep.subr.mxu0 %v248
    %812 = vmatpush1.msra.mxu0 %v247
    %813 = vmatprep.subr.mxu0 %v246
    %814 = vmatpush1.msra.mxu0 %v245
    %815 = vmatprep.subr.mxu0 %v244
    %816 = vmatpush1.msra.mxu0 %v243
    %817 = vmatprep.subr.mxu0 %v242
    %818 = vmatpush1.msra.mxu0 %v241
    %819 = vmatprep.subr.mxu0 %v240
    %820 = vmatpush1.msra.mxu0 %v239
    %821 = vmatprep.subr.mxu0 %v238
    %822 = vmatpush1.msra.mxu0 %v237
    %823 = vmatprep.subr.mxu0 %v236
    %824 = vmatpush1.msra.mxu0 %v235
    %825 = vmatprep.subr.mxu0 %v234
    %826 = vmatpush1.msra.mxu0 %v233
    %827 = vmatprep.subr.mxu0 %v232
    %828 = vmatpush1.msra.mxu0 %v231
    %829 = vmatprep.subr.mxu0 %v230
    %830 = vmatpush1.msra.mxu0 %v229
    %831 = vmatprep.subr.mxu0 %v228
    %832 = vmatpush1.msra.mxu0 %v227
    %833 = vmatprep.subr.mxu0 %v226
    %834 = vmatpush1.msra.mxu0 %v225
    %835 = vmatprep.subr.mxu0 0.0
    %836 = vmatpush2.msra.mxu0 0.0
    %837 = vmatprep.subr.mxu0 0.0
    %838 = vmatpush2.msra.mxu0 0.0
    %839 = vmatprep.subr.mxu0 0.0
    %840 = vmatpush2.msra.mxu0 0.0
    %841 = vmatprep.subr.mxu0 0.0
    %842 = vmatpush2.msra.mxu0 0.0
    %843 = vmatprep.subr.mxu0 0.0
    %844 = vmatpush2.msra.mxu0 0.0
    %845 = vmatprep.subr.mxu0 0.0
    %846 = vmatpush2.msra.mxu0 0.0
    %847 = vmatprep.subr.mxu0 0.0
    %848 = vmatpush2.msra.mxu0 0.0
    %849 = vmatprep.subr.mxu0 0.0
    %850 = vmatpush2.msra.mxu0 0.0
    %851 = vmatprep.subr.mxu0 0.0
    %852 = vmatpush2.msra.mxu0 0.0
    %853 = vmatprep.subr.mxu0 0.0
    %854 = vmatpush2.msra.mxu0 0.0
    %855 = vmatprep.subr.mxu0 0.0
    %856 = vmatpush2.msra.mxu0 0.0
    %857 = vmatprep.subr.mxu0 0.0
    %858 = vmatpush2.msra.mxu0 0.0
    %859 = vmatprep.subr.mxu0 0.0
    %860 = vmatpush2.msra.mxu0 0.0
    %861 = vmatprep.subr.mxu0 0.0
    %862 = vmatpush2.msra.mxu0 0.0
    %863 = vmatprep.subr.mxu0 0.0
    %864 = vmatpush2.msra.mxu0 0.0
    %865 = vmatprep.subr.mxu0 0.0
    %866 = vmatpush2.msra.mxu0 0.0
    %867 = vmatprep.mubr.f32.mxu0 0.0
    %868 = vmatmul.mubr.f32.gmra.mxu0 %v795
    %v869 = vpop.f32.mrf.mxu0
    %v870 = vadd.f32 0.0, %v869
    %v871 = vpop.f32.mrf.mxu0
    %v872 = vadd.f32 0.0, %v871
    %873 = vmatprep.mubr.f32.mxu0 0.0
    %874 = vmatmul.mubr.f32.gmra.mxu0 %v800
    %v875 = vpop.f32.mrf.mxu0
    %v876 = vadd.f32 0.0, %v875
    %v877 = vpop.f32.mrf.mxu0
    %v878 = vadd.f32 0.0, %v877
    %879 = vdwg.mxu0
    %880 = vmatprep.subr.mxu0 %v224
    %881 = vmatpush1.msra.mxu0 %v223
    %882 = vmatprep.subr.mxu0 %v222
    %883 = vmatpush1.msra.mxu0 %v221
    %884 = vmatprep.subr.mxu0 %v220
    %885 = vmatpush1.msra.mxu0 %v219
    %886 = vmatprep.subr.mxu0 %v218
    %887 = vmatpush1.msra.mxu0 %v217
    %888 = vmatprep.subr.mxu0 %v216
    %889 = vmatpush1.msra.mxu0 %v215
    %890 = vmatprep.subr.mxu0 %v214
    %891 = vmatpush1.msra.mxu0 %v213
    %892 = vmatprep.subr.mxu0 %v212
    %893 = vmatpush1.msra.mxu0 %v211
    %894 = vmatprep.subr.mxu0 %v210
    %895 = vmatpush1.msra.mxu0 %v209
    %896 = vmatprep.subr.mxu0 %v208
    %897 = vmatpush1.msra.mxu0 %v207
    %898 = vmatprep.subr.mxu0 %v206
    %899 = vmatpush1.msra.mxu0 %v205
    %900 = vmatprep.subr.mxu0 %v204
    %901 = vmatpush1.msra.mxu0 %v203
    %902 = vmatprep.subr.mxu0 %v202
    %903 = vmatpush1.msra.mxu0 %v201
    %904 = vmatprep.subr.mxu0 %v200
    %905 = vmatpush1.msra.mxu0 %v199
    %906 = vmatprep.subr.mxu0 %v198
    %907 = vmatpush1.msra.mxu0 %v197
    %908 = vmatprep.subr.mxu0 %v196
    %909 = vmatpush1.msra.mxu0 %v195
    %910 = vmatprep.subr.mxu0 %v194
    %911 = vmatpush1.msra.mxu0 %v193
    %912 = vmatprep.subr.mxu0 0.0
    %913 = vmatpush2.msra.mxu0 0.0
    %914 = vmatprep.subr.mxu0 0.0
    %915 = vmatpush2.msra.mxu0 0.0
    %916 = vmatprep.subr.mxu0 0.0
    %917 = vmatpush2.msra.mxu0 0.0
    %918 = vmatprep.subr.mxu0 0.0
    %919 = vmatpush2.msra.mxu0 0.0
    %920 = vmatprep.subr.mxu0 0.0
    %921 = vmatpush2.msra.mxu0 0.0
    %922 = vmatprep.subr.mxu0 0.0
    %923 = vmatpush2.msra.mxu0 0.0
    %924 = vmatprep.subr.mxu0 0.0
    %925 = vmatpush2.msra.mxu0 0.0
    %926 = vmatprep.subr.mxu0 0.0
    %927 = vmatpush2.msra.mxu0 0.0
    %928 = vmatprep.subr.mxu0 0.0
    %929 = vmatpush2.msra.mxu0 0.0
    %930 = vmatprep.subr.mxu0 0.0
    %931 = vmatpush2.msra.mxu0 0.0
    %932 = vmatprep.subr.mxu0 0.0
    %933 = vmatpush2.msra.mxu0 0.0
    %934 = vmatprep.subr.mxu0 0.0
    %935 = vmatpush2.msra.mxu0 0.0
    %936 = vmatprep.subr.mxu0 0.0
    %937 = vmatpush2.msra.mxu0 0.0
    %938 = vmatprep.subr.mxu0 0.0
    %939 = vmatpush2.msra.mxu0 0.0
    %940 = vmatprep.subr.mxu0 0.0
    %941 = vmatpush2.msra.mxu0 0.0
    %942 = vmatprep.subr.mxu0 0.0
    %943 = vmatpush2.msra.mxu0 0.0
    %944 = vmatprep.mubr.f32.mxu0 0.0
    %945 = vmatmul.mubr.f32.gmra.mxu0 %v710
    %v946 = vpop.f32.mrf.mxu0
    %v947 = vadd.f32 %v870, %v946
    %v948 = vpop.f32.mrf.mxu0
    %v949 = vadd.f32 %v872, %v948
    %950 = vmatprep.mubr.f32.mxu0 0.0
    %951 = vmatmul.mubr.f32.gmra.mxu0 %v715
    %v952 = vpop.f32.mrf.mxu0
    %v953 = vadd.f32 %v876, %v952
    %v954 = vpop.f32.mrf.mxu0
    %v955 = vadd.f32 %v878, %v954
    %956 = vdwg.mxu0
    %v957 = vadd.f32 %v947, %v514
    %v958 = vadd.f32 %v949, %v518
    %v959 = vadd.f32 %v953, %v514
    %v960 = vadd.f32 %v955, %v518
    %v961 = vtanh.pop %v957
    %v962 = vtanh.pop %v958
    %v963 = vtanh.pop %v959
    %v964 = vtanh.pop %v960
    %v965 = vmul.f32 %v961, 0.2
    %v966 = vmul.f32 %v962, 0.2
    %v967 = vmul.f32 %v963, 0.2
    %v968 = vmul.f32 %v964, 0.2
    %v969 = vadd.f32 %v965, 1.0
    %v970 = vadd.f32 %v967, 1.0
    %v971 = vmul.f32 %v969, %v710
    %v972 = vmul.f32 %v970, %v715
    %v973 = vadd.f32 %v966, 1.0
    %v974 = vadd.f32 %v968, 1.0
    %v975 = vmul.f32 %v973, %v795
    %v976 = vmul.f32 %v974, %v800
    %v977 = vadd.f32 %v971, %v975
    %v978 = vadd.f32 %v972, %v976
    %v979 = vadd.f32 %v977, %v610
    %v980 = vadd.f32 %v978, %v615
    %981 = vmatprep.subr.mxu0 0.0
    %982 = vmatpush1.msra.mxu0 0.0
    %983 = vmatprep.subr.mxu0 0.0
    %984 = vmatpush1.msra.mxu0 0.0
    %985 = vmatprep.subr.mxu0 0.0
    %986 = vmatpush1.msra.mxu0 0.0
    %987 = vmatprep.subr.mxu0 0.0
    %988 = vmatpush1.msra.mxu0 0.0
    %989 = vmatprep.subr.mxu0 0.0
    %990 = vmatpush1.msra.mxu0 0.0
    %991 = vmatprep.subr.mxu0 0.0
    %992 = vmatpush1.msra.mxu0 0.0
    %993 = vmatprep.subr.mxu0 0.0
    %994 = vmatpush1.msra.mxu0 0.0
    %995 = vmatprep.subr.mxu0 0.0
    %996 = vmatpush1.msra.mxu0 0.0
    %997 = vmatprep.subr.mxu0 0.0
    %998 = vmatpush1.msra.mxu0 0.0
    %999 = vmatprep.subr.mxu0 0.0
    %1000 = vmatpush1.msra.mxu0 0.0
    %1001 = vmatprep.subr.mxu0 0.0
    %1002 = vmatpush1.msra.mxu0 0.0
    %1003 = vmatprep.subr.mxu0 0.0
    %1004 = vmatpush1.msra.mxu0 0.0
    %1005 = vmatprep.subr.mxu0 0.0
    %1006 = vmatpush1.msra.mxu0 0.0
    %1007 = vmatprep.subr.mxu0 0.0
    %1008 = vmatpush1.msra.mxu0 0.0
    %1009 = vmatprep.subr.mxu0 0.0
    %1010 = vmatpush1.msra.mxu0 %v980
    %1011 = vmatprep.subr.mxu0 0.0
    %1012 = vmatpush1.msra.mxu0 %v979
    %1013 = vmatprep.subr.mxu0 0.0
    %1014 = vmatpush2.msra.mxu0 0.0
    %1015 = vmatprep.subr.mxu0 0.0
    %1016 = vmatpush2.msra.mxu0 0.0
    %1017 = vmatprep.subr.mxu0 0.0
    %1018 = vmatpush2.msra.mxu0 0.0
    %1019 = vmatprep.subr.mxu0 0.0
    %1020 = vmatpush2.msra.mxu0 0.0
    %1021 = vmatprep.subr.mxu0 0.0
    %1022 = vmatpush2.msra.mxu0 0.0
    %1023 = vmatprep.subr.mxu0 0.0
    %1024 = vmatpush2.msra.mxu0 0.0
    %1025 = vmatprep.subr.mxu0 0.0
    %1026 = vmatpush2.msra.mxu0 0.0
    %1027 = vmatprep.subr.mxu0 0.0
    %1028 = vmatpush2.msra.mxu0 0.0
    %1029 = vmatprep.subr.mxu0 0.0
    %1030 = vmatpush2.msra.mxu0 0.0
    %1031 = vmatprep.subr.mxu0 0.0
    %1032 = vmatpush2.msra.mxu0 0.0
    %1033 = vmatprep.subr.mxu0 0.0
    %1034 = vmatpush2.msra.mxu0 0.0
    %1035 = vmatprep.subr.mxu0 0.0
    %1036 = vmatpush2.msra.mxu0 0.0
    %1037 = vmatprep.subr.mxu0 0.0
    %1038 = vmatpush2.msra.mxu0 0.0
    %1039 = vmatprep.subr.mxu0 0.0
    %1040 = vmatpush2.msra.mxu0 0.0
    %1041 = vmatprep.subr.mxu0 0.0
    %1042 = vmatpush2.msra.mxu0 0.0
    %1043 = vmatprep.subr.mxu0 0.0
    %1044 = vmatpush2.msra.mxu0 0.0
    %1045 = vmatprep.mubr.f32.mxu0 0.0
    %1046 = vmatmul.mubr.f32.gmra.mxu0 %v113
    %v1047 = vpop.f32.mrf.mxu0
    %v1048 = vadd.f32 0.0, %v1047
    %v1049 = vpop.f32.mrf.mxu0
    %1050 = vmatprep.mubr.f32.mxu0 0.0
    %1051 = vmatmul.mubr.f32.gmra.mxu0 %v116
    %v1052 = vpop.f32.mrf.mxu0
    %v1053 = vadd.f32 0.0, %v1052
    %v1054 = vpop.f32.mrf.mxu0
    %1055 = vdwg.mxu0
    %s1056 = scalar_lea.vmem [#allocation5], 256
    %v1057 = vld [vmem:[%s1056] sm:$0xff]
    %v1058 = vld [vmem:[%s1056 + $0x8] sm:$0xff]
    %v1059 = vld [vmem:[%s1056 + $0x10] sm:$0xff]
    %v1060 = vld [vmem:[%s1056 + $0x18] sm:$0xff]
    %v1061 = vld [vmem:[%s1056 + $0x20] sm:$0xff]
    %v1062 = vld [vmem:[%s1056 + $0x28] sm:$0xff]
    %v1063 = vld [vmem:[%s1056 + $0x30] sm:$0xff]
    %v1064 = vld [vmem:[%s1056 + $0x38] sm:$0xff]
    %v1065 = vld [vmem:[%s1056 + $0x40] sm:$0xff]
    %v1066 = vld [vmem:[%s1056 + $0x48] sm:$0xff]
    %v1067 = vld [vmem:[%s1056 + $0x50] sm:$0xff]
    %v1068 = vld [vmem:[%s1056 + $0x58] sm:$0xff]
    %v1069 = vld [vmem:[%s1056 + $0x60] sm:$0xff]
    %v1070 = vld [vmem:[%s1056 + $0x68] sm:$0xff]
    %v1071 = vld [vmem:[%s1056 + $0x70] sm:$0xff]
    %v1072 = vld [vmem:[%s1056 + $0x78] sm:$0xff]
    %s1073 = scalar_lea.vmem %s3, 2
    %v1074 = vld [vmem:[%s1073] sm:$0x1]
    %v1076 = vlaneseq
    %v1077 = vshrl.u32 %v1076, 7
    %v1078 = vsub.s32 0, %v1077
    %v1079 = vrot.slane %v1074, %v1078
    %1081 = vmatprep.subr.mxu0 0.0
    %1082 = vmatpush1.msra.mxu0 %v1072
    %1083 = vmatprep.subr.mxu0 0.0
    %1084 = vmatpush1.msra.mxu0 %v1071
    %1085 = vmatprep.subr.mxu0 0.0
    %1086 = vmatpush1.msra.mxu0 %v1070
    %1087 = vmatprep.subr.mxu0 0.0
    %1088 = vmatpush1.msra.mxu0 %v1069
    %1089 = vmatprep.subr.mxu0 0.0
    %1090 = vmatpush1.msra.mxu0 %v1068
    %1091 = vmatprep.subr.mxu0 0.0
    %1092 = vmatpush1.msra.mxu0 %v1067
    %1093 = vmatprep.subr.mxu0 0.0
    %1094 = vmatpush1.msra.mxu0 %v1066
    %1095 = vmatprep.subr.mxu0 0.0
    %1096 = vmatpush1.msra.mxu0 %v1065
    %1097 = vmatprep.subr.mxu0 0.0
    %1098 = vmatpush1.msra.mxu0 %v1064
    %1099 = vmatprep.subr.mxu0 0.0
    %1100 = vmatpush1.msra.mxu0 %v1063
    %1101 = vmatprep.subr.mxu0 0.0
    %1102 = vmatpush1.msra.mxu0 %v1062
    %1103 = vmatprep.subr.mxu0 0.0
    %1104 = vmatpush1.msra.mxu0 %v1061
    %1105 = vmatprep.subr.mxu0 0.0
    %1106 = vmatpush1.msra.mxu0 %v1060
    %1107 = vmatprep.subr.mxu0 0.0
    %1108 = vmatpush1.msra.mxu0 %v1059
    %1109 = vmatprep.subr.mxu0 0.0
    %1110 = vmatpush1.msra.mxu0 %v1058
    %1111 = vmatprep.subr.mxu0 0.0
    %1112 = vmatpush1.msra.mxu0 %v1057
    %1113 = vmatprep.subr.mxu0 0.0
    %1114 = vmatpush2.msra.mxu0 0.0
    %1115 = vmatprep.subr.mxu0 0.0
    %1116 = vmatpush2.msra.mxu0 0.0
    %1117 = vmatprep.subr.mxu0 0.0
    %1118 = vmatpush2.msra.mxu0 0.0
    %1119 = vmatprep.subr.mxu0 0.0
    %1120 = vmatpush2.msra.mxu0 0.0
    %1121 = vmatprep.subr.mxu0 0.0
    %1122 = vmatpush2.msra.mxu0 0.0
    %1123 = vmatprep.subr.mxu0 0.0
    %1124 = vmatpush2.msra.mxu0 0.0
    %1125 = vmatprep.subr.mxu0 0.0
    %1126 = vmatpush2.msra.mxu0 0.0
    %1127 = vmatprep.subr.mxu0 0.0
    %1128 = vmatpush2.msra.mxu0 0.0
    %1129 = vmatprep.subr.mxu0 0.0
    %1130 = vmatpush2.msra.mxu0 0.0
    %1131 = vmatprep.subr.mxu0 0.0
    %1132 = vmatpush2.msra.mxu0 0.0
    %1133 = vmatprep.subr.mxu0 0.0
    %1134 = vmatpush2.msra.mxu0 0.0
    %1135 = vmatprep.subr.mxu0 0.0
    %1136 = vmatpush2.msra.mxu0 0.0
    %1137 = vmatprep.subr.mxu0 0.0
    %1138 = vmatpush2.msra.mxu0 0.0
    %1139 = vmatprep.subr.mxu0 0.0
    %1140 = vmatpush2.msra.mxu0 0.0
    %1141 = vmatprep.subr.mxu0 0.0
    %1142 = vmatpush2.msra.mxu0 0.0
    %1143 = vmatprep.subr.mxu0 0.0
    %1144 = vmatpush2.msra.mxu0 0.0
    %1145 = vmatprep.mubr.f32.mxu0 0.0
    %1146 = vmatmul.mubr.f32.gmra.mxu0 %v1048
    %v1147 = vpop.f32.mrf.mxu0
    %v1148 = vadd.f32 %v1079, %v1147
    %v1149 = vpop.f32.mrf.mxu0
    %1150 = vmatprep.mubr.f32.mxu0 0.0
    %1151 = vmatmul.mubr.f32.gmra.mxu0 %v1053
    %v1152 = vpop.f32.mrf.mxu0
    %v1153 = vadd.f32 %v1079, %v1152
    %v1154 = vpop.f32.mrf.mxu0
    %1155 = vdwg.mxu0
    %s1156 = scalar_lea.vmem %s4, 16
    %v1157 = vld [vmem:[%s1156] sm:$0xff]
    %s1158 = scalar_lea.vmem %s5, 2
    %v1159 = vld [vmem:[%s1158] sm:$0x1]
    %v1161 = vlaneseq
    %v1162 = vshrl.u32 %v1161, 7
    %v1163 = vsub.s32 0, %v1162
    %v1164 = vrot.slane %v1159, %v1163
    %1166 = vmatprep.subr.mxu0 0.0
    %1167 = vmatpush1.msra.mxu0 0.0
    %1168 = vmatprep.subr.mxu0 0.0
    %1169 = vmatpush1.msra.mxu0 0.0
    %1170 = vmatprep.subr.mxu0 0.0
    %1171 = vmatpush1.msra.mxu0 0.0
    %1172 = vmatprep.subr.mxu0 0.0
    %1173 = vmatpush1.msra.mxu0 0.0
    %1174 = vmatprep.subr.mxu0 0.0
    %1175 = vmatpush1.msra.mxu0 0.0
    %1176 = vmatprep.subr.mxu0 0.0
    %1177 = vmatpush1.msra.mxu0 0.0
    %1178 = vmatprep.subr.mxu0 0.0
    %1179 = vmatpush1.msra.mxu0 0.0
    %1180 = vmatprep.subr.mxu0 0.0
    %1181 = vmatpush1.msra.mxu0 0.0
    %1182 = vmatprep.subr.mxu0 0.0
    %1183 = vmatpush1.msra.mxu0 0.0
    %1184 = vmatprep.subr.mxu0 0.0
    %1185 = vmatpush1.msra.mxu0 0.0
    %1186 = vmatprep.subr.mxu0 0.0
    %1187 = vmatpush1.msra.mxu0 0.0
    %1188 = vmatprep.subr.mxu0 0.0
    %1189 = vmatpush1.msra.mxu0 0.0
    %1190 = vmatprep.subr.mxu0 0.0
    %1191 = vmatpush1.msra.mxu0 0.0
    %1192 = vmatprep.subr.mxu0 0.0
    %1193 = vmatpush1.msra.mxu0 0.0
    %1194 = vmatprep.subr.mxu0 0.0
    %1195 = vmatpush1.msra.mxu0 0.0
    %1196 = vmatprep.subr.mxu0 0.0
    %1197 = vmatpush1.msra.mxu0 %v1157
    %1198 = vmatprep.subr.mxu0 0.0
    %1199 = vmatpush2.msra.mxu0 0.0
    %1200 = vmatprep.subr.mxu0 0.0
    %1201 = vmatpush2.msra.mxu0 0.0
    %1202 = vmatprep.subr.mxu0 0.0
    %1203 = vmatpush2.msra.mxu0 0.0
    %1204 = vmatprep.subr.mxu0 0.0
    %1205 = vmatpush2.msra.mxu0 0.0
    %1206 = vmatprep.subr.mxu0 0.0
    %1207 = vmatpush2.msra.mxu0 0.0
    %1208 = vmatprep.subr.mxu0 0.0
    %1209 = vmatpush2.msra.mxu0 0.0
    %1210 = vmatprep.subr.mxu0 0.0
    %1211 = vmatpush2.msra.mxu0 0.0
    %1212 = vmatprep.subr.mxu0 0.0
    %1213 = vmatpush2.msra.mxu0 0.0
    %1214 = vmatprep.subr.mxu0 0.0
    %1215 = vmatpush2.msra.mxu0 0.0
    %1216 = vmatprep.subr.mxu0 0.0
    %1217 = vmatpush2.msra.mxu0 0.0
    %1218 = vmatprep.subr.mxu0 0.0
    %1219 = vmatpush2.msra.mxu0 0.0
    %1220 = vmatprep.subr.mxu0 0.0
    %1221 = vmatpush2.msra.mxu0 0.0
    %1222 = vmatprep.subr.mxu0 0.0
    %1223 = vmatpush2.msra.mxu0 0.0
    %1224 = vmatprep.subr.mxu0 0.0
    %1225 = vmatpush2.msra.mxu0 0.0
    %1226 = vmatprep.subr.mxu0 0.0
    %1227 = vmatpush2.msra.mxu0 0.0
    %1228 = vmatprep.subr.mxu0 0.0
    %1229 = vmatpush2.msra.mxu0 0.0
    %1230 = vmatprep.mubr.f32.mxu0 0.0
    %1231 = vmatmul.mubr.f32.gmra.mxu0 %v276
    %v1232 = vpop.f32.mrf.mxu0
    %v1233 = vadd.f32 %v1164, %v1232
    %v1234 = vpop.f32.mrf.mxu0
    %1235 = vmatprep.mubr.f32.mxu0 0.0
    %1236 = vmatmul.mubr.f32.gmra.mxu0 %v279
    %v1237 = vpop.f32.mrf.mxu0
    %v1238 = vadd.f32 %v1164, %v1237
    %v1239 = vpop.f32.mrf.mxu0
    %1240 = vdwg.mxu0
    %1241 = vmatprep.subr.mxu0 %v256
    %1242 = vmatpush1.msra.mxu0 %v255
    %1243 = vmatprep.subr.mxu0 %v254
    %1244 = vmatpush1.msra.mxu0 %v253
    %1245 = vmatprep.subr.mxu0 %v252
    %1246 = vmatpush1.msra.mxu0 %v251
    %1247 = vmatprep.subr.mxu0 %v250
    %1248 = vmatpush1.msra.mxu0 %v249
    %1249 = vmatprep.subr.mxu0 %v248
    %1250 = vmatpush1.msra.mxu0 %v247
    %1251 = vmatprep.subr.mxu0 %v246
    %1252 = vmatpush1.msra.mxu0 %v245
    %1253 = vmatprep.subr.mxu0 %v244
    %1254 = vmatpush1.msra.mxu0 %v243
    %1255 = vmatprep.subr.mxu0 %v242
    %1256 = vmatpush1.msra.mxu0 %v241
    %1257 = vmatprep.subr.mxu0 %v240
    %1258 = vmatpush1.msra.mxu0 %v239
    %1259 = vmatprep.subr.mxu0 %v238
    %1260 = vmatpush1.msra.mxu0 %v237
    %1261 = vmatprep.subr.mxu0 %v236
    %1262 = vmatpush1.msra.mxu0 %v235
    %1263 = vmatprep.subr.mxu0 %v234
    %1264 = vmatpush1.msra.mxu0 %v233
    %1265 = vmatprep.subr.mxu0 %v232
    %1266 = vmatpush1.msra.mxu0 %v231
    %1267 = vmatprep.subr.mxu0 %v230
    %1268 = vmatpush1.msra.mxu0 %v229
    %1269 = vmatprep.subr.mxu0 %v228
    %1270 = vmatpush1.msra.mxu0 %v227
    %1271 = vmatprep.subr.mxu0 %v226
    %1272 = vmatpush1.msra.mxu0 %v225
    %1273 = vmatprep.subr.mxu0 0.0
    %1274 = vmatpush2.msra.mxu0 0.0
    %1275 = vmatprep.subr.mxu0 0.0
    %1276 = vmatpush2.msra.mxu0 0.0
    %1277 = vmatprep.subr.mxu0 0.0
    %1278 = vmatpush2.msra.mxu0 0.0
    %1279 = vmatprep.subr.mxu0 0.0
    %1280 = vmatpush2.msra.mxu0 0.0
    %1281 = vmatprep.subr.mxu0 0.0
    %1282 = vmatpush2.msra.mxu0 0.0
    %1283 = vmatprep.subr.mxu0 0.0
    %1284 = vmatpush2.msra.mxu0 0.0
    %1285 = vmatprep.subr.mxu0 0.0
    %1286 = vmatpush2.msra.mxu0 0.0
    %1287 = vmatprep.subr.mxu0 0.0
    %1288 = vmatpush2.msra.mxu0 0.0
    %1289 = vmatprep.subr.mxu0 0.0
    %1290 = vmatpush2.msra.mxu0 0.0
    %1291 = vmatprep.subr.mxu0 0.0
    %1292 = vmatpush2.msra.mxu0 0.0
    %1293 = vmatprep.subr.mxu0 0.0
    %1294 = vmatpush2.msra.mxu0 0.0
    %1295 = vmatprep.subr.mxu0 0.0
    %1296 = vmatpush2.msra.mxu0 0.0
    %1297 = vmatprep.subr.mxu0 0.0
    %1298 = vmatpush2.msra.mxu0 0.0
    %1299 = vmatprep.subr.mxu0 0.0
    %1300 = vmatpush2.msra.mxu0 0.0
    %1301 = vmatprep.subr.mxu0 0.0
    %1302 = vmatpush2.msra.mxu0 0.0
    %1303 = vmatprep.subr.mxu0 0.0
    %1304 = vmatpush2.msra.mxu0 0.0
    %1305 = vmatprep.mubr.f32.mxu0 0.0
    %1306 = vmatmul.mubr.f32.gmra.mxu0 %v1233
    %v1307 = vpop.f32.mrf.mxu0
    %v1308 = vadd.f32 0.0, %v1307
    %v1309 = vpop.f32.mrf.mxu0
    %v1310 = vadd.f32 0.0, %v1309
    %1311 = vmatprep.mubr.f32.mxu0 0.0
    %1312 = vmatmul.mubr.f32.gmra.mxu0 %v1238
    %v1313 = vpop.f32.mrf.mxu0
    %v1314 = vadd.f32 0.0, %v1313
    %v1315 = vpop.f32.mrf.mxu0
    %v1316 = vadd.f32 0.0, %v1315
    %1317 = vdwg.mxu0
    %1318 = vmatprep.subr.mxu0 %v224
    %1319 = vmatpush1.msra.mxu0 %v223
    %1320 = vmatprep.subr.mxu0 %v222
    %1321 = vmatpush1.msra.mxu0 %v221
    %1322 = vmatprep.subr.mxu0 %v220
    %1323 = vmatpush1.msra.mxu0 %v219
    %1324 = vmatprep.subr.mxu0 %v218
    %1325 = vmatpush1.msra.mxu0 %v217
    %1326 = vmatprep.subr.mxu0 %v216
    %1327 = vmatpush1.msra.mxu0 %v215
    %1328 = vmatprep.subr.mxu0 %v214
    %1329 = vmatpush1.msra.mxu0 %v213
    %1330 = vmatprep.subr.mxu0 %v212
    %1331 = vmatpush1.msra.mxu0 %v211
    %1332 = vmatprep.subr.mxu0 %v210
    %1333 = vmatpush1.msra.mxu0 %v209
    %1334 = vmatprep.subr.mxu0 %v208
    %1335 = vmatpush1.msra.mxu0 %v207
    %1336 = vmatprep.subr.mxu0 %v206
    %1337 = vmatpush1.msra.mxu0 %v205
    %1338 = vmatprep.subr.mxu0 %v204
    %1339 = vmatpush1.msra.mxu0 %v203
    %1340 = vmatprep.subr.mxu0 %v202
    %1341 = vmatpush1.msra.mxu0 %v201
    %1342 = vmatprep.subr.mxu0 %v200
    %1343 = vmatpush1.msra.mxu0 %v199
    %1344 = vmatprep.subr.mxu0 %v198
    %1345 = vmatpush1.msra.mxu0 %v197
    %1346 = vmatprep.subr.mxu0 %v196
    %1347 = vmatpush1.msra.mxu0 %v195
    %1348 = vmatprep.subr.mxu0 %v194
    %1349 = vmatpush1.msra.mxu0 %v193
    %1350 = vmatprep.subr.mxu0 0.0
    %1351 = vmatpush2.msra.mxu0 0.0
    %1352 = vmatprep.subr.mxu0 0.0
    %1353 = vmatpush2.msra.mxu0 0.0
    %1354 = vmatprep.subr.mxu0 0.0
    %1355 = vmatpush2.msra.mxu0 0.0
    %1356 = vmatprep.subr.mxu0 0.0
    %1357 = vmatpush2.msra.mxu0 0.0
    %1358 = vmatprep.subr.mxu0 0.0
    %1359 = vmatpush2.msra.mxu0 0.0
    %1360 = vmatprep.subr.mxu0 0.0
    %1361 = vmatpush2.msra.mxu0 0.0
    %1362 = vmatprep.subr.mxu0 0.0
    %1363 = vmatpush2.msra.mxu0 0.0
    %1364 = vmatprep.subr.mxu0 0.0
    %1365 = vmatpush2.msra.mxu0 0.0
    %1366 = vmatprep.subr.mxu0 0.0
    %1367 = vmatpush2.msra.mxu0 0.0
    %1368 = vmatprep.subr.mxu0 0.0
    %1369 = vmatpush2.msra.mxu0 0.0
    %1370 = vmatprep.subr.mxu0 0.0
    %1371 = vmatpush2.msra.mxu0 0.0
    %1372 = vmatprep.subr.mxu0 0.0
    %1373 = vmatpush2.msra.mxu0 0.0
    %1374 = vmatprep.subr.mxu0 0.0
    %1375 = vmatpush2.msra.mxu0 0.0
    %1376 = vmatprep.subr.mxu0 0.0
    %1377 = vmatpush2.msra.mxu0 0.0
    %1378 = vmatprep.subr.mxu0 0.0
    %1379 = vmatpush2.msra.mxu0 0.0
    %1380 = vmatprep.subr.mxu0 0.0
    %1381 = vmatpush2.msra.mxu0 0.0
    %1382 = vmatprep.mubr.f32.mxu0 0.0
    %1383 = vmatmul.mubr.f32.gmra.mxu0 %v1148
    %v1384 = vpop.f32.mrf.mxu0
    %v1385 = vadd.f32 %v1308, %v1384
    %v1386 = vpop.f32.mrf.mxu0
    %v1387 = vadd.f32 %v1310, %v1386
    %1388 = vmatprep.mubr.f32.mxu0 0.0
    %1389 = vmatmul.mubr.f32.gmra.mxu0 %v1153
    %v1390 = vpop.f32.mrf.mxu0
    %v1391 = vadd.f32 %v1314, %v1390
    %v1392 = vpop.f32.mrf.mxu0
    %v1393 = vadd.f32 %v1316, %v1392
    %1394 = vdwg.mxu0
    %v1395 = vadd.f32 %v1385, %v514
    %v1396 = vadd.f32 %v1387, %v518
    %v1397 = vadd.f32 %v1391, %v514
    %v1398 = vadd.f32 %v1393, %v518
    %v1399 = vtanh.pop %v1395
    %v1400 = vtanh.pop %v1396
    %v1401 = vtanh.pop %v1397
    %v1402 = vtanh.pop %v1398
    %v1403 = vmul.f32 %v1399, 0.2
    %v1404 = vmul.f32 %v1400, 0.2
    %v1405 = vmul.f32 %v1401, 0.2
    %v1406 = vmul.f32 %v1402, 0.2
    %v1407 = vadd.f32 %v1403, 1.0
    %v1408 = vadd.f32 %v1405, 1.0
    %v1409 = vmul.f32 %v1407, %v1148
    %v1410 = vmul.f32 %v1408, %v1153
    %v1411 = vadd.f32 %v1404, 1.0
    %v1412 = vadd.f32 %v1406, 1.0
    %v1413 = vmul.f32 %v1411, %v1233
    %v1414 = vmul.f32 %v1412, %v1238
    %v1415 = vadd.f32 %v1409, %v1413
    %v1416 = vadd.f32 %v1410, %v1414
    %v1417 = vadd.f32 %v1415, %v1048
    %v1418 = vadd.f32 %v1416, %v1053
    %v1419 = vld [vmem:[#allocation10] sm:$0xff]
    %v1420 = vld [vmem:[#allocation10 + $0x8] sm:$0xff]
    %v1421 = vld [vmem:[#allocation10 + $0x10] sm:$0xff]
    %v1422 = vld [vmem:[#allocation10 + $0x18] sm:$0xff]
    %v1423 = vld [vmem:[#allocation10 + $0x20] sm:$0xff]
    %v1424 = vld [vmem:[#allocation10 + $0x28] sm:$0xff]
    %v1425 = vld [vmem:[#allocation10 + $0x30] sm:$0xff]
    %v1426 = vld [vmem:[#allocation10 + $0x38] sm:$0xff]
    %v1427 = vld [vmem:[#allocation10 + $0x40] sm:$0xff]
    %v1428 = vld [vmem:[#allocation10 + $0x48] sm:$0xff]
    %v1429 = vld [vmem:[#allocation10 + $0x50] sm:$0xff]
    %v1430 = vld [vmem:[#allocation10 + $0x58] sm:$0xff]
    %v1431 = vld [vmem:[#allocation10 + $0x60] sm:$0xff]
    %v1432 = vld [vmem:[#allocation10 + $0x68] sm:$0xff]
    %v1433 = vld [vmem:[#allocation10 + $0x70] sm:$0xff]
    %v1434 = vld [vmem:[#allocation10 + $0x78] sm:$0xff]
    %v1435 = vld [vmem:[%s10] sm:$0x1]
    %v1437 = vlaneseq
    %v1438 = vshrl.u32 %v1437, 7
    %v1439 = vsub.s32 0, %v1438
    %v1440 = vrot.slane %v1435, %v1439
    %1442 = vmatprep.subr.mxu0 0.0
    %1443 = vmatpush1.msra.mxu0 %v1434
    %1444 = vmatprep.subr.mxu0 0.0
    %1445 = vmatpush1.msra.mxu0 %v1433
    %1446 = vmatprep.subr.mxu0 0.0
    %1447 = vmatpush1.msra.mxu0 %v1432
    %1448 = vmatprep.subr.mxu0 0.0
    %1449 = vmatpush1.msra.mxu0 %v1431
    %1450 = vmatprep.subr.mxu0 0.0
    %1451 = vmatpush1.msra.mxu0 %v1430
    %1452 = vmatprep.subr.mxu0 0.0
    %1453 = vmatpush1.msra.mxu0 %v1429
    %1454 = vmatprep.subr.mxu0 0.0
    %1455 = vmatpush1.msra.mxu0 %v1428
    %1456 = vmatprep.subr.mxu0 0.0
    %1457 = vmatpush1.msra.mxu0 %v1427
    %1458 = vmatprep.subr.mxu0 0.0
    %1459 = vmatpush1.msra.mxu0 %v1426
    %1460 = vmatprep.subr.mxu0 0.0
    %1461 = vmatpush1.msra.mxu0 %v1425
    %1462 = vmatprep.subr.mxu0 0.0
    %1463 = vmatpush1.msra.mxu0 %v1424
    %1464 = vmatprep.subr.mxu0 0.0
    %1465 = vmatpush1.msra.mxu0 %v1423
    %1466 = vmatprep.subr.mxu0 0.0
    %1467 = vmatpush1.msra.mxu0 %v1422
    %1468 = vmatprep.subr.mxu0 0.0
    %1469 = vmatpush1.msra.mxu0 %v1421
    %1470 = vmatprep.subr.mxu0 0.0
    %1471 = vmatpush1.msra.mxu0 %v1420
    %1472 = vmatprep.subr.mxu0 0.0
    %1473 = vmatpush1.msra.mxu0 %v1419
    %1474 = vmatprep.subr.mxu0 0.0
    %1475 = vmatpush2.msra.mxu0 0.0
    %1476 = vmatprep.subr.mxu0 0.0
    %1477 = vmatpush2.msra.mxu0 0.0
    %1478 = vmatprep.subr.mxu0 0.0
    %1479 = vmatpush2.msra.mxu0 0.0
    %1480 = vmatprep.subr.mxu0 0.0
    %1481 = vmatpush2.msra.mxu0 0.0
    %1482 = vmatprep.subr.mxu0 0.0
    %1483 = vmatpush2.msra.mxu0 0.0
    %1484 = vmatprep.subr.mxu0 0.0
    %1485 = vmatpush2.msra.mxu0 0.0
    %1486 = vmatprep.subr.mxu0 0.0
    %1487 = vmatpush2.msra.mxu0 0.0
    %1488 = vmatprep.subr.mxu0 0.0
    %1489 = vmatpush2.msra.mxu0 0.0
    %1490 = vmatprep.subr.mxu0 0.0
    %1491 = vmatpush2.msra.mxu0 0.0
    %1492 = vmatprep.subr.mxu0 0.0
    %1493 = vmatpush2.msra.mxu0 0.0
    %1494 = vmatprep.subr.mxu0 0.0
    %1495 = vmatpush2.msra.mxu0 0.0
    %1496 = vmatprep.subr.mxu0 0.0
    %1497 = vmatpush2.msra.mxu0 0.0
    %1498 = vmatprep.subr.mxu0 0.0
    %1499 = vmatpush2.msra.mxu0 0.0
    %1500 = vmatprep.subr.mxu0 0.0
    %1501 = vmatpush2.msra.mxu0 0.0
    %1502 = vmatprep.subr.mxu0 0.0
    %1503 = vmatpush2.msra.mxu0 0.0
    %1504 = vmatprep.subr.mxu0 0.0
    %1505 = vmatpush2.msra.mxu0 0.0
    %1506 = vmatprep.mubr.f32.mxu0 0.0
    %1507 = vmatmul.mubr.f32.gmra.mxu0 %v1417
    %v1508 = vpop.f32.mrf.mxu0
    %v1509 = vadd.f32 %v1440, %v1508
    %v1510 = vpop.f32.mrf.mxu0
    %1511 = vmatprep.mubr.f32.mxu0 0.0
    %1512 = vmatmul.mubr.f32.gmra.mxu0 %v1418
    %v1513 = vpop.f32.mrf.mxu0
    %v1514 = vadd.f32 %v1440, %v1513
    %v1515 = vpop.f32.mrf.mxu0
    %1516 = vdwg.mxu0
    %1517 = vst [vmem:[#allocation11] sm:$0xff] %v1509
    %1518 = vst [vmem:[#allocation11 + $0x8] sm:$0xff] %v1514
    // Predicated region
    $region66: #{tpu_custom_call.1} parent=1 // pred_check
      _
    $region67: #{tpu_custom_call.1} parent=1 // pred_check_branch
      %1520 = sbr.rel (0) target = $region69
    $region68: #{tpu_custom_call.1} parent=1 // pred_region
      %s1522 = ssub.s32 256, 256
      %1523 = vsyncadd [#allocation4], %s1522
      %s1524 = sshll.u32 [#allocation11], 4
      %s1525 = int_to_ptr.vmem [resolvable:$true] %s1524
      %1530 = dma.vmem_to_hbm [thread:$0]  %s1525, 256, %s11, [#allocation4], 128, 128, 8
    $region69: #{tpu_custom_call.1} parent=1 // pred_fallthru
      _
    // Predicated region
    $region70: #{tpu_custom_call.1} parent=1 // pred_check
      _
    $region71: #{tpu_custom_call.1} parent=1 // pred_check_branch
      %1532 = sbr.rel (0) target = $region73
    $region72: #{tpu_custom_call.1} parent=1 // pred_region
      %1533 = dma.done [#allocation4], 256
    $region73: #{tpu_custom_call.1} parent=1 // pred_fallthru
      _
    %1534 = vsyncpa [#allocation3], 1
    %1535 = vsyncpa [#allocation6], 1
    %1536 = vsyncpa [#allocation9], 1
    %1537 = vsyncpa [#allocation4], 1

</llo_original>
